<compile_context>
chip_gen: v7x
topology: tpu7x:2x2x1
jax: 0.10.0
libtpu: 0.0.40
codegen_flags: <defaults>
</compile_context>

<pallas_src>
import jax
import jax.numpy as jnp
from jax.experimental import pallas as pl
from jax.experimental.pallas import tpu as pltpu

_MIB = 1024 * 1024


def _select_budgets():
    """Per-TPU-generation VMEM / tile budgets (queried once, outside jit)."""
    cap = None
    try:
        cap = getattr(pltpu.get_tpu_info(), "vmem_capacity_bytes", None)
    except Exception:
        cap = None
    if cap is not None and cap >= 96 * _MIB:
        # v5e / v6e: 128 MiB physical VMEM -> bigger x tiles (fewer ~0.35 us
        # grid steps, longer contiguous DMA rows), larger scoped-VMEM limit.
        return dict(max_x_tile_bytes=12 * _MIB,
                    vmem_limit_bytes=64 * _MIB,
                    fused_vmem_budget=48 * _MIB)
    # v7x (64 MiB VMEM) or unknown backend: conservative, leave headroom for
    # the double-buffered x / out blocks.
    return dict(max_x_tile_bytes=4 * _MIB,
                vmem_limit_bytes=32 * _MIB,
                fused_vmem_budget=20 * _MIB)


# ---------------------------------------------------------------------------
# Fused path: all three heads in a single pallas_call, grid over images.
# ---------------------------------------------------------------------------
def _fused_heads_kernel(*refs):
    # refs = (w0, b0, w1, b1, w2, b2, x0, x1, x2, o0, o1, o2)
    n_heads = len(refs) // 4
    for k in range(n_heads):
        w_ref = refs[2 * k]            # (C_out, C_in_k)   resident weights
        b_ref = refs[2 * k + 1]        # (C_out, 1)        resident bias (f32)
        x_ref = refs[2 * n_heads + k]  # (C_in_k, HW_k)    one image
        o_ref = refs[3 * n_heads + k]  # (C_out, HW_k)     lane-dense output
        acc = jnp.dot(w_ref[...], x_ref[...],
                      preferred_element_type=jnp.float32)
        o_ref[...] = (acc + b_ref[...]).astype(o_ref.dtype)


def _fused_vmem_bytes(xs_3d, ws):
    """Conservative per-step VMEM estimate for the fused call (double-buffered
    x and out blocks + resident weights/bias)."""
    c_out = ws[0].shape[0]
    total = 0
    for x, w in zip(xs_3d, ws):
        _, c_in, hw = x.shape
        isz = jnp.dtype(x.dtype).itemsize
        total += 2 * hw * isz * (c_in + c_out)                        # x + out
        total += 2 * (w.size * jnp.dtype(w.dtype).itemsize + c_out * 4)
    return total


def _fused_heads_call(xs_3d, ws, bs, vmem_limit_bytes):
    n = xs_3d[0].shape[0]
    n_heads = len(xs_3d)
    c_out = ws[0].shape[0]

    in_specs = []
    for k in range(n_heads):
        c_in = ws[k].shape[1]
        # Weights / bias stay resident across the whole grid (constant map).
        in_specs.append(pl.BlockSpec((c_out, c_in), lambda i: (0, 0)))
        in_specs.append(pl.BlockSpec((c_out, 1), lambda i: (0, 0)))
    for k in range(n_heads):
        _, c_in, hw = xs_3d[k].shape
        # One image (squeezed N), all channels, full spatial extent.
        in_specs.append(pl.BlockSpec((None, c_in, hw), lambda i: (i, 0, 0)))

    out_specs = [
        pl.BlockSpec((None, c_out, xs_3d[k].shape[2]), lambda i: (i, 0, 0))
        for k in range(n_heads)
    ]
    out_shape = tuple(
        jax.ShapeDtypeStruct((n, c_out, xs_3d[k].shape[2]), xs_3d[k].dtype)
        for k in range(n_heads)
    )

    interleaved_wb = [a for pair in zip(ws, bs) for a in pair]

    return pl.pallas_call(
        _fused_heads_kernel,
        out_shape=out_shape,
        grid_spec=pltpu.PrefetchScalarGridSpec(
            num_scalar_prefetch=0,
            grid=(n,),
            in_specs=in_specs,
            out_specs=out_specs,
        ),
        compiler_params=pltpu.CompilerParams(
            # Images are independent -> both v7x TensorCores busy when n >= 2.
            dimension_semantics=("parallel",),
            vmem_limit_bytes=vmem_limit_bytes,
        ),
    )(*interleaved_wb, *xs_3d)


# ---------------------------------------------------------------------------
# Tiled per-head fallback (large feature maps / tight VMEM).
# ---------------------------------------------------------------------------
def _conv1x1_kernel(w_ref, b_ref, x_ref, o_ref):
    acc = jnp.dot(w_ref[...], x_ref[...], preferred_element_type=jnp.float32)
    o_ref[...] = (acc + b_ref[...]).astype(o_ref.dtype)


def _choose_hw_tile(hw, c_in, itemsize, max_x_tile_bytes):
    """Spatial (lane) tile: full H*W if the x block fits the budget, else the
    largest multiple of 128 that does.  The (8,128) layout rule needs >= 128
    lanes unless the tile equals the full extent, so for very large C_in the
    budget is advisory only (never exceeds hw)."""
    if hw * c_in * itemsize <= max_x_tile_bytes:
        return hw
    t = (max_x_tile_bytes // (c_in * itemsize)) // 128 * 128
    return int(min(hw, max(128, t)))


def conv1x1_pallas(x_nchw, weight_oc, bias_o, *,
                   max_x_tile_bytes=4 * _MIB, vmem_limit_bytes=32 * _MIB):
    """1x1 convolution (nn.Conv2d, kernel_size=1) on NCHW input.

    Activations are never cast; the (tiny) weights are aligned to x.dtype,
    accumulation is always f32, output keeps x's dtype.
    """
    n, c_in, h, w = x_nchw.shape
    c_out = weight_oc.shape[0]
    hw = h * w
    out_dtype = x_nchw.dtype

    # NCHW -> (N, C_in, H*W): a free reshape, no transpose / extra HBM pass.
    x_in = x_nchw.reshape(n, c_in, hw)
    w_in = weight_oc.astype(x_in.dtype)            # tiny, matches MXU inputs
    b_in = bias_o.reshape(c_out, 1).astype(jnp.float32)

    itemsize = jnp.dtype(x_in.dtype).itemsize
    t_hw = _choose_hw_tile(hw, c_in, itemsize, max_x_tile_bytes)
    if n == 1 and t_hw >= hw and hw > 128:
        # v7x has two TensorCores sharded over "parallel" grid axes; a (1, 1)
        # grid leaves one idle.  Split the hw axis into >= 2 tiles.
        half = (hw + 1) // 2
        t_hw = int(min(hw, max(128, ((half + 127) // 128) * 128)))
    grid = (n, pl.cdiv(hw, t_hw))

    out = pl.pallas_call(
        _conv1x1_kernel,
        out_shape=jax.ShapeDtypeStruct((n, c_out, hw), out_dtype),
        grid_spec=pltpu.PrefetchScalarGridSpec(
            num_scalar_prefetch=0,
            grid=grid,
            in_specs=[
                # Weights and bias stay resident across the whole grid.
                pl.BlockSpec((c_out, c_in), lambda ni, j: (0, 0)),
                pl.BlockSpec((c_out, 1), lambda ni, j: (0, 0)),
                # One image (squeezed N), all channels, one spatial tile.
                pl.BlockSpec((None, c_in, t_hw), lambda ni, j: (ni, 0, j)),
            ],
            out_specs=pl.BlockSpec((None, c_out, t_hw), lambda ni, j: (ni, 0, j)),
        ),
        compiler_params=pltpu.CompilerParams(
            dimension_semantics=("parallel", "parallel"),
            vmem_limit_bytes=vmem_limit_bytes,
        ),
    )(w_in, b_in, x_in)

    return out.reshape(n, c_out, h, w)


# ---------------------------------------------------------------------------
# Full head: one fused dispatch when per-image blocks fit VMEM, else tiled.
# ---------------------------------------------------------------------------
def yolo_head_pallas(xs_nchw, weights, biases, *,
                     max_x_tile_bytes=4 * _MIB,
                     vmem_limit_bytes=32 * _MIB,
                     fused_vmem_budget=20 * _MIB):
    c_out = weights[0].shape[0]
    xs_3d = [x.reshape(x.shape[0], x.shape[1], x.shape[2] * x.shape[3])
             for x in xs_nchw]
    # Only the small weights are cast to match the activations; the big
    # activation arrays are never cast in the wrapper (no extra HBM pass).
    ws = [w.astype(x.dtype) for w, x in zip(weights, xs_3d)]
    bs = [b.reshape(c_out, 1).astype(jnp.float32) for b in biases]

    if _fused_vmem_bytes(xs_3d, ws) <= fused_vmem_budget:
        outs = _fused_heads_call(xs_3d, ws, bs, vmem_limit_bytes)
        return [o.reshape(x.shape[0], c_out, x.shape[2], x.shape[3])
                for o, x in zip(outs, xs_nchw)]

    # Fallback for feature maps too large for per-image fused blocks.
    return [conv1x1_pallas(x, w, b,
                           max_x_tile_bytes=max_x_tile_bytes,
                           vmem_limit_bytes=vmem_limit_bytes)
            for x, w, b in zip(xs_nchw, weights, biases)]


class YoloV4HeadPallas:
    """Pallas equivalent of the PyTorch YoloV4Head (three 1x1 conv heads)."""

    def __init__(self, num_classes, anchors, key, compute_dtype=None):
        self.num_classes = num_classes
        self.anchors = anchors
        c_out = (num_classes + 5) * len(anchors)
        self.c_out = c_out
        param_dtype = jnp.float32 if compute_dtype is None else compute_dtype
        self.params = {}
        for name, c_in in (("small", 256), ("medium", 512), ("big", 1024)):
            key, kw, kb = jax.random.split(key, 3)
            # PyTorch Conv2d default init: U(-1/sqrt(fan_in), 1/sqrt(fan_in))
            bound = 1.0 / (c_in ** 0.5)
            wgt = jax.random.uniform(kw, (c_out, c_in), jnp.float32, -bound, bound)
            b = jax.random.uniform(kb, (c_out,), jnp.float32, -bound, bound)
            # Weights pre-cast ONCE here (review): activations are never cast
            # per call; use compute_dtype only if upstream hands bf16 inputs.
            self.params[name] = (wgt.astype(param_dtype), b)
        self._budgets = _select_budgets()   # hardware query outside jit
        self._forward = jax.jit(self._forward_impl)

    def _forward_impl(self, params, small, medium, big):
        names = ("small", "medium", "big")
        ws = [params[nm][0] for nm in names]
        bs = [params[nm][1] for nm in names]
        return yolo_head_pallas([small, medium, big], ws, bs, **self._budgets)

    def __call__(self, small, medium, big):
        return self._forward(self.params, small, medium, big)


def _reference_conv1x1(x_nchw, w_oc, b_o):
    # einsum reference matching nn.Conv2d(kernel_size=1)
    return (jnp.einsum("nchw,oc->nohw", x_nchw.astype(jnp.float32),
                       w_oc.astype(jnp.float32))
            + b_o.astype(jnp.float32)[None, :, None, None])


if __name__ == "__main__":
    num_classes = 3
    anchors = [(12, 16), (19, 36), (40, 28)]  # 3 anchors -> C_out = (3+5)*3 = 24

    root = jax.random.PRNGKey(0)
    param_key, data_key = jax.random.split(root)

    head = YoloV4HeadPallas(num_classes, anchors, param_key)

    k1, k2, k3 = jax.random.split(data_key, 3)
    # Small multiscale feature maps (channels fixed by the module definition).
    small = jax.random.normal(k1, (2, 256, 16, 16), jnp.float32)
    medium = jax.random.normal(k2, (2, 512, 8, 8), jnp.float32)
    big = jax.random.normal(k3, (2, 1024, 4, 4), jnp.float32)

    outs = head(small, medium, big)
    outs = [jax.block_until_ready(o) for o in outs]

    refs = [
        _reference_conv1x1(small, *head.params["small"]),
        _reference_conv1x1(medium, *head.params["medium"]),
        _reference_conv1x1(big, *head.params["big"]),
    ]
    for o, r in zip(outs, refs):
        assert o.shape == r.shape
        assert jnp.allclose(o, r, atol=1e-4, rtol=1e-4)

    # Exercise the tiled per-head fallback path (forced 128-lane hw tiles).
    w_s, b_s = head.params["small"]
    tiled = jax.block_until_ready(
        conv1x1_pallas(small, w_s, b_s, max_x_tile_bytes=128 * 256 * 4))
    assert jnp.allclose(tiled, refs[0], atol=1e-4, rtol=1e-4)

    # Exercise the n == 1 hw-split (two v7x TensorCores) path.
    single = jax.block_until_ready(conv1x1_pallas(small[:1], w_s, b_s))
    assert jnp.allclose(single, refs[0][:1], atol=1e-4, rtol=1e-4)

    # bf16 path: upstream hands bf16 activations; weights pre-cast at init,
    # activations NOT cast in the wrapper; f32 accumulation in-kernel.
    head_bf16 = YoloV4HeadPallas(num_classes, anchors, param_key,
                                 compute_dtype=jnp.bfloat16)
    outs_bf16 = head_bf16(small.astype(jnp.bfloat16),
                          medium.astype(jnp.bfloat16),
                          big.astype(jnp.bfloat16))
    outs_bf16 = [jax.block_until_ready(o) for o in outs_bf16]
    for o, r in zip(outs_bf16, refs):
        assert o.shape == r.shape
        assert jnp.allclose(o.astype(jnp.float32), r, atol=5e-2, rtol=5e-2)

    print("KERNEL_OK")
</pallas_src>

<mosaic_0001>
module attributes {stable_mosaic.version = 11 : i64} {
  func.func @_fused_heads_kernel(%arg0: i32, %arg1: memref<24x256xf32, #tpu.memory_space<vmem>>, %arg2: memref<24x1xf32, #tpu.memory_space<vmem>>, %arg3: memref<24x512xf32, #tpu.memory_space<vmem>>, %arg4: memref<24x1xf32, #tpu.memory_space<vmem>>, %arg5: memref<24x1024xf32, #tpu.memory_space<vmem>>, %arg6: memref<24x1xf32, #tpu.memory_space<vmem>>, %arg7: memref<1x256x256xf32, #tpu.memory_space<vmem>>, %arg8: memref<1x512x64xf32, #tpu.memory_space<vmem>>, %arg9: memref<1x1024x16xf32, #tpu.memory_space<vmem>>, %arg10: memref<1x24x256xf32, #tpu.memory_space<vmem>>, %arg11: memref<1x24x64xf32, #tpu.memory_space<vmem>>, %arg12: memref<1x24x16xf32, #tpu.memory_space<vmem>>) attributes {dimension_semantics = [#tpu.dimension_semantics<parallel>], iteration_bounds = array<i64: 2>, scalar_prefetch = 0 : i64, scratch_operands = 0 : i64, tpu.core_type = #tpu.core_type<tc>, window_params = [{pipeline_mode = #tpu.pipeline_mode<synchronous>, transform_indices = @transform_0, window_bounds = array<i64: 24, 256>}, {pipeline_mode = #tpu.pipeline_mode<synchronous>, transform_indices = @transform_1, window_bounds = array<i64: 24, 1>}, {pipeline_mode = #tpu.pipeline_mode<synchronous>, transform_indices = @transform_2, window_bounds = array<i64: 24, 512>}, {pipeline_mode = #tpu.pipeline_mode<synchronous>, transform_indices = @transform_3, window_bounds = array<i64: 24, 1>}, {pipeline_mode = #tpu.pipeline_mode<synchronous>, transform_indices = @transform_4, window_bounds = array<i64: 24, 1024>}, {pipeline_mode = #tpu.pipeline_mode<synchronous>, transform_indices = @transform_5, window_bounds = array<i64: 24, 1>}, {transform_indices = @transform_6, window_bounds = array<i64: 1, 256, 256>}, {transform_indices = @transform_7, window_bounds = array<i64: 1, 512, 64>}, {transform_indices = @transform_8, window_bounds = array<i64: 1, 1024, 16>}, {transform_indices = @transform_9, window_bounds = array<i64: 1, 24, 256>}, {transform_indices = @transform_10, window_bounds = array<i64: 1, 24, 64>}, {transform_indices = @transform_11, window_bounds = array<i64: 1, 24, 16>}]} {
    %c0 = arith.constant 0 : index
    %c0_0 = arith.constant 0 : index
    %0 = vector.load %arg1[%c0, %c0_0] : memref<24x256xf32, #tpu.memory_space<vmem>>, vector<24x256xf32>
    %c0_1 = arith.constant 0 : index
    %c0_2 = arith.constant 0 : index
    %c0_3 = arith.constant 0 : index
    %1 = vector.load %arg7[%c0_1, %c0_2, %c0_3] : memref<1x256x256xf32, #tpu.memory_space<vmem>>, vector<1x256x256xf32>
    %2 = vector.shape_cast %1 : vector<1x256x256xf32> to vector<256x256xf32>
    %cst = arith.constant dense<0.000000e+00> : vector<24x256xf32>
    %3 = tpu.matmul %0, %2, %cst {dimension_numbers = #tpu.dot_dimension_numbers<[1], [0], [0], [1], [0, 0, 1, 1], [], []>} : vector<24x256xf32>, vector<256x256xf32>, vector<24x256xf32> -> vector<24x256xf32>
    %c0_4 = arith.constant 0 : index
    %c0_5 = arith.constant 0 : index
    %4 = vector.load %arg2[%c0_4, %c0_5] : memref<24x1xf32, #tpu.memory_space<vmem>>, vector<24x1xf32>
    %5 = vector.broadcast %4 : vector<24x1xf32> to vector<24x256xf32>
    %6 = arith.addf %3, %5 : vector<24x256xf32>
    %c0_6 = arith.constant 0 : index
    %c0_7 = arith.constant 0 : index
    %c0_8 = arith.constant 0 : index
    %7 = vector.load %arg10[%c0_6, %c0_7, %c0_8] : memref<1x24x256xf32, #tpu.memory_space<vmem>>, vector<1x24x256xf32>
    %8 = vector.shape_cast %7 : vector<1x24x256xf32> to vector<24x256xf32>
    %9 = vector.shape_cast %6 : vector<24x256xf32> to vector<1x24x256xf32>
    tpu.vector_store %arg10[%c0_6, %c0_7, %c0_8], %9 {strides = array<i32>} : memref<1x24x256xf32, #tpu.memory_space<vmem>>, vector<1x24x256xf32>,
    %c0_9 = arith.constant 0 : index
    %c0_10 = arith.constant 0 : index
    %10 = vector.load %arg3[%c0_9, %c0_10] : memref<24x512xf32, #tpu.memory_space<vmem>>, vector<24x512xf32>
    %c0_11 = arith.constant 0 : index
    %c0_12 = arith.constant 0 : index
    %c0_13 = arith.constant 0 : index
    %11 = vector.load %arg8[%c0_11, %c0_12, %c0_13] : memref<1x512x64xf32, #tpu.memory_space<vmem>>, vector<1x512x64xf32>
    %12 = vector.shape_cast %11 : vector<1x512x64xf32> to vector<512x64xf32>
    %cst_14 = arith.constant dense<0.000000e+00> : vector<24x64xf32>
    %13 = tpu.matmul %10, %12, %cst_14 {dimension_numbers = #tpu.dot_dimension_numbers<[1], [0], [0], [1], [0, 0, 1, 1], [], []>} : vector<24x512xf32>, vector<512x64xf32>, vector<24x64xf32> -> vector<24x64xf32>
    %c0_15 = arith.constant 0 : index
    %c0_16 = arith.constant 0 : index
    %14 = vector.load %arg4[%c0_15, %c0_16] : memref<24x1xf32, #tpu.memory_space<vmem>>, vector<24x1xf32>
    %15 = vector.broadcast %14 : vector<24x1xf32> to vector<24x64xf32>
    %16 = arith.addf %13, %15 : vector<24x64xf32>
    %c0_17 = arith.constant 0 : index
    %c0_18 = arith.constant 0 : index
    %c0_19 = arith.constant 0 : index
    %17 = vector.load %arg11[%c0_17, %c0_18, %c0_19] : memref<1x24x64xf32, #tpu.memory_space<vmem>>, vector<1x24x64xf32>
    %18 = vector.shape_cast %17 : vector<1x24x64xf32> to vector<24x64xf32>
    %19 = vector.shape_cast %16 : vector<24x64xf32> to vector<1x24x64xf32>
    tpu.vector_store %arg11[%c0_17, %c0_18, %c0_19], %19 {strides = array<i32>} : memref<1x24x64xf32, #tpu.memory_space<vmem>>, vector<1x24x64xf32>,
    %c0_20 = arith.constant 0 : index
    %c0_21 = arith.constant 0 : index
    %20 = vector.load %arg5[%c0_20, %c0_21] : memref<24x1024xf32, #tpu.memory_space<vmem>>, vector<24x1024xf32>
    %c0_22 = arith.constant 0 : index
    %c0_23 = arith.constant 0 : index
    %c0_24 = arith.constant 0 : index
    %21 = vector.load %arg9[%c0_22, %c0_23, %c0_24] : memref<1x1024x16xf32, #tpu.memory_space<vmem>>, vector<1x1024x16xf32>
    %22 = vector.shape_cast %21 : vector<1x1024x16xf32> to vector<1024x16xf32>
    %cst_25 = arith.constant dense<0.000000e+00> : vector<24x16xf32>
    %23 = tpu.matmul %20, %22, %cst_25 {dimension_numbers = #tpu.dot_dimension_numbers<[1], [0], [0], [1], [0, 0, 1, 1], [], []>} : vector<24x1024xf32>, vector<1024x16xf32>, vector<24x16xf32> -> vector<24x16xf32>
    %c0_26 = arith.constant 0 : index
    %c0_27 = arith.constant 0 : index
    %24 = vector.load %arg6[%c0_26, %c0_27] : memref<24x1xf32, #tpu.memory_space<vmem>>, vector<24x1xf32>
    %25 = vector.broadcast %24 : vector<24x1xf32> to vector<24x16xf32>
    %26 = arith.addf %23, %25 : vector<24x16xf32>
    %c0_28 = arith.constant 0 : index
    %c0_29 = arith.constant 0 : index
    %c0_30 = arith.constant 0 : index
    %27 = vector.load %arg12[%c0_28, %c0_29, %c0_30] : memref<1x24x16xf32, #tpu.memory_space<vmem>>, vector<1x24x16xf32>
    %28 = vector.shape_cast %27 : vector<1x24x16xf32> to vector<24x16xf32>
    %29 = vector.shape_cast %26 : vector<24x16xf32> to vector<1x24x16xf32>
    tpu.vector_store %arg12[%c0_28, %c0_29, %c0_30], %29 {strides = array<i32>} : memref<1x24x16xf32, #tpu.memory_space<vmem>>, vector<1x24x16xf32>,
    return
  }
  func.func @transform_0(%arg0: i32) -> (i32, i32) {
    %c0_i32 = arith.constant 0 : i32
    %c0_i32_0 = arith.constant 0 : i32
    %c0_i32_1 = arith.constant 0 : i32
    return %c0_i32, %c0_i32_0 : i32, i32
  }
  func.func @transform_1(%arg0: i32) -> (i32, i32) {
    %c0_i32 = arith.constant 0 : i32
    %c0_i32_0 = arith.constant 0 : i32
    %c0_i32_1 = arith.constant 0 : i32
    return %c0_i32, %c0_i32_0 : i32, i32
  }
  func.func @transform_2(%arg0: i32) -> (i32, i32) {
    %c0_i32 = arith.constant 0 : i32
    %c0_i32_0 = arith.constant 0 : i32
    %c0_i32_1 = arith.constant 0 : i32
    return %c0_i32, %c0_i32_0 : i32, i32
  }
  func.func @transform_3(%arg0: i32) -> (i32, i32) {
    %c0_i32 = arith.constant 0 : i32
    %c0_i32_0 = arith.constant 0 : i32
    %c0_i32_1 = arith.constant 0 : i32
    return %c0_i32, %c0_i32_0 : i32, i32
  }
  func.func @transform_4(%arg0: i32) -> (i32, i32) {
    %c0_i32 = arith.constant 0 : i32
    %c0_i32_0 = arith.constant 0 : i32
    %c0_i32_1 = arith.constant 0 : i32
    return %c0_i32, %c0_i32_0 : i32, i32
  }
  func.func @transform_5(%arg0: i32) -> (i32, i32) {
    %c0_i32 = arith.constant 0 : i32
    %c0_i32_0 = arith.constant 0 : i32
    %c0_i32_1 = arith.constant 0 : i32
    return %c0_i32, %c0_i32_0 : i32, i32
  }
  func.func @transform_6(%arg0: i32) -> (i32, i32, i32) {
    %c0_i32 = arith.constant 0 : i32
    %c0_i32_0 = arith.constant 0 : i32
    %c0_i32_1 = arith.constant 0 : i32
    return %arg0, %c0_i32, %c0_i32_0 : i32, i32, i32
  }
  func.func @transform_7(%arg0: i32) -> (i32, i32, i32) {
    %c0_i32 = arith.constant 0 : i32
    %c0_i32_0 = arith.constant 0 : i32
    %c0_i32_1 = arith.constant 0 : i32
    return %arg0, %c0_i32, %c0_i32_0 : i32, i32, i32
  }
  func.func @transform_8(%arg0: i32) -> (i32, i32, i32) {
    %c0_i32 = arith.constant 0 : i32
    %c0_i32_0 = arith.constant 0 : i32
    %c0_i32_1 = arith.constant 0 : i32
    return %arg0, %c0_i32, %c0_i32_0 : i32, i32, i32
  }
  func.func @transform_9(%arg0: i32) -> (i32, i32, i32) {
    %c0_i32 = arith.constant 0 : i32
    %c0_i32_0 = arith.constant 0 : i32
    %c0_i32_1 = arith.constant 0 : i32
    return %arg0, %c0_i32, %c0_i32_0 : i32, i32, i32
  }
  func.func @transform_10(%arg0: i32) -> (i32, i32, i32) {
    %c0_i32 = arith.constant 0 : i32
    %c0_i32_0 = arith.constant 0 : i32
    %c0_i32_1 = arith.constant 0 : i32
    return %arg0, %c0_i32, %c0_i32_0 : i32, i32, i32
  }
  func.func @transform_11(%arg0: i32) -> (i32, i32, i32) {
    %c0_i32 = arith.constant 0 : i32
    %c0_i32_0 = arith.constant 0 : i32
    %c0_i32_1 = arith.constant 0 : i32
    return %arg0, %c0_i32, %c0_i32_0 : i32, i32, i32
  }
}

</mosaic_0001>

<llo_original>
// kernel: _forward_impl.1
$region0: #{_forward_impl.1}
  #allocation0 [shape = 'u32[]', space=smem, size = 0x4, offset = 0x4, fixed_abs, tag = 'smem constant byte address 0x4 - core index']
  #allocation1 [shape = 'u32[144,128]{1,0:T(1,128)}', space=vmem, size = 0x12000, scoped, tag = 'internal scratch']
  %s0 = inlined_call_operand.vmem [shape: f32[24,256], index: 0, kind: input, shape index: {}]
  %s1 = inlined_call_operand.vmem [shape: f32[24,1], index: 1, kind: input, shape index: {}]
  %s2 = inlined_call_operand.vmem [shape: f32[24,512], index: 2, kind: input, shape index: {}]
  %s3 = inlined_call_operand.vmem [shape: f32[24,1], index: 3, kind: input, shape index: {}]
  %s4 = inlined_call_operand.vmem [shape: f32[24,1024], index: 4, kind: input, shape index: {}]
  %s5 = inlined_call_operand.vmem [shape: f32[24,1], index: 5, kind: input, shape index: {}]
  %s6 = inlined_call_operand.vmem [shape: f32[2,256,256], index: 6, kind: input, shape index: {}]
  %s7 = inlined_call_operand.vmem [shape: f32[2,512,64], index: 7, kind: input, shape index: {}]
  %s8 = inlined_call_operand.vmem [shape: f32[2,1024,16], index: 8, kind: input, shape index: {}]
  %s9 = inlined_call_operand.vmem [shape: f32[2,24,256], index: 9, kind: output, shape index: {0}]
  %s10 = inlined_call_operand.vmem [shape: f32[2,24,64], index: 10, kind: output, shape index: {1}]
  %s11 = inlined_call_operand.vmem [shape: f32[2,24,16], index: 11, kind: output, shape index: {2}]
  %12 = xla_tuple %s9, %s10, %s11
  %s13 = sld [smem:[#allocation0]]
  $region85: #{_forward_impl.1} parent=0
    _
  %s15 = ssub.s32 1, %s13
  %s16 = scalar_select 0, %s15, %s13
  loop: start=0, step=1, limit=4
  $region2: #{_forward_impl.1} parent=0 // loop_pre_header
    _
  $region3: #{_forward_impl.1} parent=0 // loop_header
    %s18 = sphi 0, %s22
    %p19 = scmp.ge.s32.totalorder %s18, 4
    %s26 = sphi 0, %s26
    %s28 = sphi 0, %s26
    %s29 = sphi 0, %s28
    %s43 = sphi 0, %s29
    %s47 = sphi 0, %s47
    %s49 = sphi 0, %s47
    %s50 = sphi 0, %s49
    %s64 = sphi 0, %s50
    %s68 = sphi 0, %s68
    %s70 = sphi 0, %s68
    %s71 = sphi 0, %s70
    %s85 = sphi 0, %s71
    %s89 = sphi 0, %s89
    %s91 = sphi 0, %s89
    %s92 = sphi 0, %s91
    %s106 = sphi 0, %s92
    %s110 = sphi 0, %s110
    %s112 = sphi 0, %s110
    %s113 = sphi 0, %s112
    %s127 = sphi 0, %s113
    %s131 = sphi 0, %s131
    %s133 = sphi 0, %s131
    %s134 = sphi 0, %s133
    %s148 = sphi 0, %s134
    %s154 = sphi 0, %s156
    %s157 = sphi 0, %s154
    %s158 = sphi 0, %s157
    %s174 = sphi 0, %s158
    %s180 = sphi 0, %s182
    %s183 = sphi 0, %s180
    %s184 = sphi 0, %s183
    %s200 = sphi 0, %s184
    %s206 = sphi 0, %s208
    %s209 = sphi 0, %s206
    %s210 = sphi 0, %s209
    %s226 = sphi 0, %s210
    %s232 = sphi 0, %s234
    %s235 = sphi 0, %s232
    %s236 = sphi 0, %s235
    %s252 = sphi 0, %s236
    %s258 = sphi 0, %s260
    %s261 = sphi 0, %s258
    %s262 = sphi 0, %s261
    %s278 = sphi 0, %s262
    %s284 = sphi 0, %s286
    %s287 = sphi 0, %s284
    %s288 = sphi 0, %s287
    %s304 = sphi 0, %s288
  $region4: #{_forward_impl.1} parent=0 // loop_header_branch
    %21 = sbr.rel (%p19) target = $region8
  $region5: #{_forward_impl.1} parent=0 // loop_body
    %s23 = ssub.s32 %s18, 1
    %s24 = ssub.s32 %s18, 2
    %s25 = sadd.s32 %s18, 1
    %s27 = sadd.s32 %s26, 1
    %p30 = scmp.eq.s32.totalorder %s18, 1
    %p31 = scmp.ne.s32.totalorder %s26, %s28
    %p32 = scmp.eq.s32.totalorder %s18, 0
    %p33 = por %p31, %p32
    %p34 = scmp.ne.s32.totalorder %s26, %s28
    %p35 = scmp.eq.s32.totalorder %s23, 1
    %p36 = por %p34, %p35
    %p37 = scmp.ne.s32.totalorder %s28, %s29
    %p38 = scmp.eq.s32.totalorder %s23, 0
    %p39 = por %p37, %p38
    %p40 = scmp.ne.s32.totalorder %s28, %s29
    %p41 = scmp.eq.s32.totalorder %s24, 1
    %p42 = por %p40, %p41
    %p44 = scmp.ne.s32.totalorder %s29, %s43
    %p45 = scmp.eq.s32.totalorder %s24, 0
    %p46 = por %p44, %p45
    %s48 = sadd.s32 %s47, 1
    %p51 = scmp.eq.s32.totalorder %s18, 1
    %p52 = scmp.ne.s32.totalorder %s47, %s49
    %p53 = scmp.eq.s32.totalorder %s18, 0
    %p54 = por %p52, %p53
    %p55 = scmp.ne.s32.totalorder %s47, %s49
    %p56 = scmp.eq.s32.totalorder %s23, 1
    %p57 = por %p55, %p56
    %p58 = scmp.ne.s32.totalorder %s49, %s50
    %p59 = scmp.eq.s32.totalorder %s23, 0
    %p60 = por %p58, %p59
    %p61 = scmp.ne.s32.totalorder %s49, %s50
    %p62 = scmp.eq.s32.totalorder %s24, 1
    %p63 = por %p61, %p62
    %p65 = scmp.ne.s32.totalorder %s50, %s64
    %p66 = scmp.eq.s32.totalorder %s24, 0
    %p67 = por %p65, %p66
    %s69 = sadd.s32 %s68, 1
    %p72 = scmp.eq.s32.totalorder %s18, 1
    %p73 = scmp.ne.s32.totalorder %s68, %s70
    %p74 = scmp.eq.s32.totalorder %s18, 0
    %p75 = por %p73, %p74
    %p76 = scmp.ne.s32.totalorder %s68, %s70
    %p77 = scmp.eq.s32.totalorder %s23, 1
    %p78 = por %p76, %p77
    %p79 = scmp.ne.s32.totalorder %s70, %s71
    %p80 = scmp.eq.s32.totalorder %s23, 0
    %p81 = por %p79, %p80
    %p82 = scmp.ne.s32.totalorder %s70, %s71
    %p83 = scmp.eq.s32.totalorder %s24, 1
    %p84 = por %p82, %p83
    %p86 = scmp.ne.s32.totalorder %s71, %s85
    %p87 = scmp.eq.s32.totalorder %s24, 0
    %p88 = por %p86, %p87
    %s90 = sadd.s32 %s89, 1
    %p93 = scmp.eq.s32.totalorder %s18, 1
    %p94 = scmp.ne.s32.totalorder %s89, %s91
    %p95 = scmp.eq.s32.totalorder %s18, 0
    %p96 = por %p94, %p95
    %p97 = scmp.ne.s32.totalorder %s89, %s91
    %p98 = scmp.eq.s32.totalorder %s23, 1
    %p99 = por %p97, %p98
    %p100 = scmp.ne.s32.totalorder %s91, %s92
    %p101 = scmp.eq.s32.totalorder %s23, 0
    %p102 = por %p100, %p101
    %p103 = scmp.ne.s32.totalorder %s91, %s92
    %p104 = scmp.eq.s32.totalorder %s24, 1
    %p105 = por %p103, %p104
    %p107 = scmp.ne.s32.totalorder %s92, %s106
    %p108 = scmp.eq.s32.totalorder %s24, 0
    %p109 = por %p107, %p108
    %s111 = sadd.s32 %s110, 1
    %p114 = scmp.eq.s32.totalorder %s18, 1
    %p115 = scmp.ne.s32.totalorder %s110, %s112
    %p116 = scmp.eq.s32.totalorder %s18, 0
    %p117 = por %p115, %p116
    %p118 = scmp.ne.s32.totalorder %s110, %s112
    %p119 = scmp.eq.s32.totalorder %s23, 1
    %p120 = por %p118, %p119
    %p121 = scmp.ne.s32.totalorder %s112, %s113
    %p122 = scmp.eq.s32.totalorder %s23, 0
    %p123 = por %p121, %p122
    %p124 = scmp.ne.s32.totalorder %s112, %s113
    %p125 = scmp.eq.s32.totalorder %s24, 1
    %p126 = por %p124, %p125
    %p128 = scmp.ne.s32.totalorder %s113, %s127
    %p129 = scmp.eq.s32.totalorder %s24, 0
    %p130 = por %p128, %p129
    %s132 = sadd.s32 %s131, 1
    %p135 = scmp.eq.s32.totalorder %s18, 1
    %p136 = scmp.ne.s32.totalorder %s131, %s133
    %p137 = scmp.eq.s32.totalorder %s18, 0
    %p138 = por %p136, %p137
    %p139 = scmp.ne.s32.totalorder %s131, %s133
    %p140 = scmp.eq.s32.totalorder %s23, 1
    %p141 = por %p139, %p140
    %p142 = scmp.ne.s32.totalorder %s133, %s134
    %p143 = scmp.eq.s32.totalorder %s23, 0
    %p144 = por %p142, %p143
    %p145 = scmp.ne.s32.totalorder %s133, %s134
    %p146 = scmp.eq.s32.totalorder %s24, 1
    %p147 = por %p145, %p146
    %p149 = scmp.ne.s32.totalorder %s134, %s148
    %p150 = scmp.eq.s32.totalorder %s24, 0
    %p151 = por %p149, %p150
    %s152 = ssub.s32 %s18, %s25
    %p153 = scmp.eq.s32.totalorder %s152, 0
    %s155 = sadd.s32 %s154, 1
    %s156 = scalar_select %p153, %s154, %s155
    %p159 = pneg %p153
    %p160 = scmp.eq.s32.totalorder %s18, 1
    %p161 = por %p159, %p160
    %p162 = scmp.ne.s32.totalorder %s154, %s157
    %p163 = scmp.eq.s32.totalorder %s18, 0
    %p164 = por %p162, %p163
    %p165 = scmp.ne.s32.totalorder %s154, %s157
    %p166 = scmp.eq.s32.totalorder %s23, 1
    %p167 = por %p165, %p166
    %p168 = scmp.ne.s32.totalorder %s157, %s158
    %p169 = scmp.eq.s32.totalorder %s23, 0
    %p170 = por %p168, %p169
    %p171 = scmp.ne.s32.totalorder %s157, %s158
    %p172 = scmp.eq.s32.totalorder %s24, 1
    %p173 = por %p171, %p172
    %p175 = scmp.ne.s32.totalorder %s158, %s174
    %p176 = scmp.eq.s32.totalorder %s24, 0
    %p177 = por %p175, %p176
    %s178 = ssub.s32 %s18, %s25
    %p179 = scmp.eq.s32.totalorder %s178, 0
    %s181 = sadd.s32 %s180, 1
    %s182 = scalar_select %p179, %s180, %s181
    %p185 = pneg %p179
    %p186 = scmp.eq.s32.totalorder %s18, 1
    %p187 = por %p185, %p186
    %p188 = scmp.ne.s32.totalorder %s180, %s183
    %p189 = scmp.eq.s32.totalorder %s18, 0
    %p190 = por %p188, %p189
    %p191 = scmp.ne.s32.totalorder %s180, %s183
    %p192 = scmp.eq.s32.totalorder %s23, 1
    %p193 = por %p191, %p192
    %p194 = scmp.ne.s32.totalorder %s183, %s184
    %p195 = scmp.eq.s32.totalorder %s23, 0
    %p196 = por %p194, %p195
    %p197 = scmp.ne.s32.totalorder %s183, %s184
    %p198 = scmp.eq.s32.totalorder %s24, 1
    %p199 = por %p197, %p198
    %p201 = scmp.ne.s32.totalorder %s184, %s200
    %p202 = scmp.eq.s32.totalorder %s24, 0
    %p203 = por %p201, %p202
    %s204 = ssub.s32 %s18, %s25
    %p205 = scmp.eq.s32.totalorder %s204, 0
    %s207 = sadd.s32 %s206, 1
    %s208 = scalar_select %p205, %s206, %s207
    %p211 = pneg %p205
    %p212 = scmp.eq.s32.totalorder %s18, 1
    %p213 = por %p211, %p212
    %p214 = scmp.ne.s32.totalorder %s206, %s209
    %p215 = scmp.eq.s32.totalorder %s18, 0
    %p216 = por %p214, %p215
    %p217 = scmp.ne.s32.totalorder %s206, %s209
    %p218 = scmp.eq.s32.totalorder %s23, 1
    %p219 = por %p217, %p218
    %p220 = scmp.ne.s32.totalorder %s209, %s210
    %p221 = scmp.eq.s32.totalorder %s23, 0
    %p222 = por %p220, %p221
    %p223 = scmp.ne.s32.totalorder %s209, %s210
    %p224 = scmp.eq.s32.totalorder %s24, 1
    %p225 = por %p223, %p224
    %p227 = scmp.ne.s32.totalorder %s210, %s226
    %p228 = scmp.eq.s32.totalorder %s24, 0
    %p229 = por %p227, %p228
    %s230 = ssub.s32 %s18, %s25
    %p231 = scmp.eq.s32.totalorder %s230, 0
    %s233 = sadd.s32 %s232, 1
    %s234 = scalar_select %p231, %s232, %s233
    %p237 = pneg %p231
    %p238 = scmp.eq.s32.totalorder %s18, 1
    %p239 = por %p237, %p238
    %p240 = scmp.ne.s32.totalorder %s232, %s235
    %p241 = scmp.eq.s32.totalorder %s18, 0
    %p242 = por %p240, %p241
    %p243 = scmp.ne.s32.totalorder %s232, %s235
    %p244 = scmp.eq.s32.totalorder %s23, 1
    %p245 = por %p243, %p244
    %p246 = scmp.ne.s32.totalorder %s235, %s236
    %p247 = scmp.eq.s32.totalorder %s23, 0
    %p248 = por %p246, %p247
    %p249 = scmp.ne.s32.totalorder %s235, %s236
    %p250 = scmp.eq.s32.totalorder %s24, 1
    %p251 = por %p249, %p250
    %p253 = scmp.ne.s32.totalorder %s236, %s252
    %p254 = scmp.eq.s32.totalorder %s24, 0
    %p255 = por %p253, %p254
    %s256 = ssub.s32 %s18, %s25
    %p257 = scmp.eq.s32.totalorder %s256, 0
    %s259 = sadd.s32 %s258, 1
    %s260 = scalar_select %p257, %s258, %s259
    %p263 = pneg %p257
    %p264 = scmp.eq.s32.totalorder %s18, 1
    %p265 = por %p263, %p264
    %p266 = scmp.ne.s32.totalorder %s258, %s261
    %p267 = scmp.eq.s32.totalorder %s18, 0
    %p268 = por %p266, %p267
    %p269 = scmp.ne.s32.totalorder %s258, %s261
    %p270 = scmp.eq.s32.totalorder %s23, 1
    %p271 = por %p269, %p270
    %p272 = scmp.ne.s32.totalorder %s261, %s262
    %p273 = scmp.eq.s32.totalorder %s23, 0
    %p274 = por %p272, %p273
    %p275 = scmp.ne.s32.totalorder %s261, %s262
    %p276 = scmp.eq.s32.totalorder %s24, 1
    %p277 = por %p275, %p276
    %p279 = scmp.ne.s32.totalorder %s262, %s278
    %p280 = scmp.eq.s32.totalorder %s24, 0
    %p281 = por %p279, %p280
    %s282 = ssub.s32 %s18, %s25
    %p283 = scmp.eq.s32.totalorder %s282, 0
    %s285 = sadd.s32 %s284, 1
    %s286 = scalar_select %p283, %s284, %s285
    %p289 = pneg %p283
    %p290 = scmp.eq.s32.totalorder %s18, 1
    %p291 = por %p289, %p290
    %p292 = scmp.ne.s32.totalorder %s284, %s287
    %p293 = scmp.eq.s32.totalorder %s18, 0
    %p294 = por %p292, %p293
    %p295 = scmp.ne.s32.totalorder %s284, %s287
    %p296 = scmp.eq.s32.totalorder %s23, 1
    %p297 = por %p295, %p296
    %p298 = scmp.ne.s32.totalorder %s287, %s288
    %p299 = scmp.eq.s32.totalorder %s23, 0
    %p300 = por %p298, %p299
    %p301 = scmp.ne.s32.totalorder %s287, %s288
    %p302 = scmp.eq.s32.totalorder %s24, 1
    %p303 = por %p301, %p302
    %p305 = scmp.ne.s32.totalorder %s288, %s304
    %p306 = scmp.eq.s32.totalorder %s24, 0
    %p307 = por %p305, %p306
    %p308 = scmp.le.s32.totalorder 1, %s18
    %p309 = scmp.lt.s32.totalorder %s18, 3
    %p310 = pnand %p308, %p309
    %p311 = pneg %p310
    // Predicated region
    $region9: #{_forward_impl.1} parent=5 // pred_check
      _
    $region10: #{_forward_impl.1} parent=5 // pred_check_branch
      %313 = sbr.rel (%p310) target = $region12
    $region11: #{_forward_impl.1} parent=5 // pred_region
      %s314 = ssub.s32 %s18, 1
      // Predicated region
      $region13: #{_forward_impl.1} parent=11 // pred_check
        %p315 = pneg %p39
      $region14: #{_forward_impl.1} parent=11 // pred_check_branch
        %317 = sbr.rel (%p315) target = $region16
      $region15: #{_forward_impl.1} parent=11 // pred_region
        _
      $region16: #{_forward_impl.1} parent=11 // pred_fallthru
        _
      // Predicated region
      $region17: #{_forward_impl.1} parent=11 // pred_check
        %p318 = pneg %p60
      $region18: #{_forward_impl.1} parent=11 // pred_check_branch
        %320 = sbr.rel (%p318) target = $region20
      $region19: #{_forward_impl.1} parent=11 // pred_region
        _
      $region20: #{_forward_impl.1} parent=11 // pred_fallthru
        _
      // Predicated region
      $region21: #{_forward_impl.1} parent=11 // pred_check
        %p321 = pneg %p81
      $region22: #{_forward_impl.1} parent=11 // pred_check_branch
        %323 = sbr.rel (%p321) target = $region24
      $region23: #{_forward_impl.1} parent=11 // pred_region
        _
      $region24: #{_forward_impl.1} parent=11 // pred_fallthru
        _
      // Predicated region
      $region25: #{_forward_impl.1} parent=11 // pred_check
        %p324 = pneg %p102
      $region26: #{_forward_impl.1} parent=11 // pred_check_branch
        %326 = sbr.rel (%p324) target = $region28
      $region27: #{_forward_impl.1} parent=11 // pred_region
        _
      $region28: #{_forward_impl.1} parent=11 // pred_fallthru
        _
      // Predicated region
      $region29: #{_forward_impl.1} parent=11 // pred_check
        %p327 = pneg %p123
      $region30: #{_forward_impl.1} parent=11 // pred_check_branch
        %329 = sbr.rel (%p327) target = $region32
      $region31: #{_forward_impl.1} parent=11 // pred_region
        _
      $region32: #{_forward_impl.1} parent=11 // pred_fallthru
        _
      // Predicated region
      $region33: #{_forward_impl.1} parent=11 // pred_check
        %p330 = pneg %p144
      $region34: #{_forward_impl.1} parent=11 // pred_check_branch
        %332 = sbr.rel (%p330) target = $region36
      $region35: #{_forward_impl.1} parent=11 // pred_region
        _
      $region36: #{_forward_impl.1} parent=11 // pred_fallthru
        _
    $region12: #{_forward_impl.1} parent=5 // pred_fallthru
      _
    %p333 = scmp.lt.s32.totalorder %s18, 2
    // Predicated region
    $region37: #{_forward_impl.1} parent=5 // pred_check
      %p334 = pneg %p333
    $region38: #{_forward_impl.1} parent=5 // pred_check_branch
      %336 = sbr.rel (%p334) target = $region40
    $region39: #{_forward_impl.1} parent=5 // pred_region
      // Predicated region
      $region41: #{_forward_impl.1} parent=39 // pred_check
        %p337 = pneg %p164
      $region42: #{_forward_impl.1} parent=39 // pred_check_branch
        %339 = sbr.rel (%p337) target = $region44
      $region43: #{_forward_impl.1} parent=39 // pred_region
        %p340 = scmp.lt.s32.totalorder %s18, 1
        %s341 = scalar_select %p340, %s18, 1
        %s342 = smul.addr %s341, 64
        %s343 = smul.addr %s342, 8
        %s344 = scalar_lea.vmem %s6, %s343
      $region44: #{_forward_impl.1} parent=39 // pred_fallthru
        _
      // Predicated region
      $region45: #{_forward_impl.1} parent=39 // pred_check
        %p345 = pneg %p190
      $region46: #{_forward_impl.1} parent=39 // pred_check_branch
        %347 = sbr.rel (%p345) target = $region48
      $region47: #{_forward_impl.1} parent=39 // pred_region
        %p348 = scmp.lt.s32.totalorder %s18, 1
        %s349 = scalar_select %p348, %s18, 1
        %s350 = smul.addr %s349, 64
        %s351 = smul.addr %s350, 8
        %s352 = scalar_lea.vmem %s7, %s351
      $region48: #{_forward_impl.1} parent=39 // pred_fallthru
        _
      // Predicated region
      $region49: #{_forward_impl.1} parent=39 // pred_check
        %p353 = pneg %p216
      $region50: #{_forward_impl.1} parent=39 // pred_check_branch
        %355 = sbr.rel (%p353) target = $region52
      $region51: #{_forward_impl.1} parent=39 // pred_region
        %p356 = scmp.lt.s32.totalorder %s18, 1
        %s357 = scalar_select %p356, %s18, 1
        %s358 = smul.addr %s357, 128
        %s359 = smul.addr %s358, 8
        %s360 = scalar_lea.vmem %s8, %s359
      $region52: #{_forward_impl.1} parent=39 // pred_fallthru
        _
    $region40: #{_forward_impl.1} parent=5 // pred_fallthru
      _
    %p361 = scmp.le.s32.totalorder 1, %s18
    %p362 = scmp.lt.s32.totalorder %s18, 3
    %p363 = pnand %p361, %p362
    %p364 = pneg %p363
    // Predicated region
    $region53: #{_forward_impl.1} parent=5 // pred_check
      _
    $region54: #{_forward_impl.1} parent=5 // pred_check_branch
      %366 = sbr.rel (%p363) target = $region56
    $region55: #{_forward_impl.1} parent=5 // pred_region
      %s367 = ssub.s32 %s18, 1
      %p368 = pneg %p39
      %p369 = pneg %p36
      %p370 = pneg %p60
      %p371 = pneg %p57
      %p372 = pneg %p81
      %p373 = pneg %p78
      %p374 = pneg %p102
      %p375 = pneg %p99
      %p376 = pneg %p123
      %p377 = pneg %p120
      %p378 = pneg %p144
      %p379 = pneg %p141
      %p380 = scmp.lt.s32.totalorder %s23, 1
      %s381 = scalar_select %p380, %s23, 1
      %s382 = smul.addr %s381, 64
      %s383 = smul.addr %s382, 8
      %s384 = scalar_lea.vmem %s6, %s383
      %p385 = pneg %p170
      %p386 = pneg %p167
      %p387 = scmp.lt.s32.totalorder %s23, 1
      %s388 = scalar_select %p387, %s23, 1
      %s389 = smul.addr %s388, 64
      %s390 = smul.addr %s389, 8
      %s391 = scalar_lea.vmem %s7, %s390
      %p392 = pneg %p196
      %p393 = pneg %p193
      %p394 = scmp.lt.s32.totalorder %s23, 1
      %s395 = scalar_select %p394, %s23, 1
      %s396 = smul.addr %s395, 128
      %s397 = smul.addr %s396, 8
      %s398 = scalar_lea.vmem %s8, %s397
      %p399 = pneg %p222
      %p400 = pneg %p219
      %p401 = pneg %p248
      %p402 = pneg %p245
      %p403 = scmp.lt.s32.totalorder %s23, 1
      %s404 = scalar_select %p403, %s23, 1
      %s405 = smul.addr %s404, 6
      %s406 = smul.addr %s405, 8
      %s407 = scalar_lea.vmem %s9, %s406
      %p408 = pneg %p274
      %p409 = pneg %p271
      %p410 = scmp.lt.s32.totalorder %s23, 1
      %s411 = scalar_select %p410, %s23, 1
      %s412 = smul.addr %s411, 3
      %s413 = smul.addr %s412, 8
      %s414 = scalar_lea.vmem %s10, %s413
      %p415 = pneg %p300
      %p416 = pneg %p297
      %p417 = scmp.lt.s32.totalorder %s23, 1
      %s418 = scalar_select %p417, %s23, 1
      %s419 = smul.addr %s418, 3
      %s420 = smul.addr %s419, 8
      %s421 = scalar_lea.vmem %s11, %s420
      %p422 = scmp.lt.s32.totalorder %s23, 1
      %s423 = scalar_select %p422, %s23, 1
      %s424 = smul.addr %s423, 64
      %s425 = smul.addr %s424, 8
      %s426 = scalar_lea.vmem %s6, %s425
      %p427 = scmp.lt.s32.totalorder %s23, 1
      %s428 = scalar_select %p427, %s23, 1
      %s429 = smul.addr %s428, 64
      %s430 = smul.addr %s429, 8
      %s431 = scalar_lea.vmem %s7, %s430
      %p432 = scmp.lt.s32.totalorder %s23, 1
      %s433 = scalar_select %p432, %s23, 1
      %s434 = smul.addr %s433, 128
      %s435 = smul.addr %s434, 8
      %s436 = scalar_lea.vmem %s8, %s435
      %p437 = scmp.lt.s32.totalorder %s23, 1
      %s438 = scalar_select %p437, %s23, 1
      %s439 = smul.addr %s438, 6
      %s440 = smul.addr %s439, 8
      %s441 = scalar_lea.vmem %s9, %s440
      %p442 = scmp.lt.s32.totalorder %s23, 1
      %s443 = scalar_select %p442, %s23, 1
      %s444 = smul.addr %s443, 3
      %s445 = smul.addr %s444, 8
      %s446 = scalar_lea.vmem %s10, %s445
      %p447 = scmp.lt.s32.totalorder %s23, 1
      %s448 = scalar_select %p447, %s23, 1
      %s449 = smul.addr %s448, 3
      %s450 = smul.addr %s449, 8
      %s451 = scalar_lea.vmem %s11, %s450
      %v452 = vld [vmem:[%s0] sm:$0xff]
      %v453 = vld [vmem:[%s0 + $0x8] sm:$0xff]
      %v454 = vld [vmem:[%s0 + $0x10] sm:$0xff]
      %v455 = vld [vmem:[%s0 + $0x18] sm:$0xff]
      %v456 = vld [vmem:[%s0 + $0x20] sm:$0xff]
      %v457 = vld [vmem:[%s0 + $0x28] sm:$0xff]
      %v458 = vld [vmem:[%s426] sm:$0xff]
      %v459 = vld [vmem:[%s426 + $0x8] sm:$0xff]
      %v460 = vld [vmem:[%s426 + $0x10] sm:$0xff]
      %v461 = vld [vmem:[%s426 + $0x18] sm:$0xff]
      %v462 = vld [vmem:[%s426 + $0x20] sm:$0xff]
      %v463 = vld [vmem:[%s426 + $0x28] sm:$0xff]
      %v464 = vld [vmem:[%s426 + $0x30] sm:$0xff]
      %v465 = vld [vmem:[%s426 + $0x38] sm:$0xff]
      %v466 = vld [vmem:[%s426 + $0x40] sm:$0xff]
      %v467 = vld [vmem:[%s426 + $0x48] sm:$0xff]
      %v468 = vld [vmem:[%s426 + $0x50] sm:$0xff]
      %v469 = vld [vmem:[%s426 + $0x58] sm:$0xff]
      %v470 = vld [vmem:[%s426 + $0x60] sm:$0xff]
      %v471 = vld [vmem:[%s426 + $0x68] sm:$0xff]
      %v472 = vld [vmem:[%s426 + $0x70] sm:$0xff]
      %v473 = vld [vmem:[%s426 + $0x78] sm:$0xff]
      %v474 = vld [vmem:[%s426 + $0x80] sm:$0xff]
      %v475 = vld [vmem:[%s426 + $0x88] sm:$0xff]
      %v476 = vld [vmem:[%s426 + $0x90] sm:$0xff]
      %v477 = vld [vmem:[%s426 + $0x98] sm:$0xff]
      %v478 = vld [vmem:[%s426 + $0xa0] sm:$0xff]
      %v479 = vld [vmem:[%s426 + $0xa8] sm:$0xff]
      %v480 = vld [vmem:[%s426 + $0xb0] sm:$0xff]
      %v481 = vld [vmem:[%s426 + $0xb8] sm:$0xff]
      %v482 = vld [vmem:[%s426 + $0xc0] sm:$0xff]
      %v483 = vld [vmem:[%s426 + $0xc8] sm:$0xff]
      %v484 = vld [vmem:[%s426 + $0xd0] sm:$0xff]
      %v485 = vld [vmem:[%s426 + $0xd8] sm:$0xff]
      %v486 = vld [vmem:[%s426 + $0xe0] sm:$0xff]
      %v487 = vld [vmem:[%s426 + $0xe8] sm:$0xff]
      %v488 = vld [vmem:[%s426 + $0xf0] sm:$0xff]
      %v489 = vld [vmem:[%s426 + $0xf8] sm:$0xff]
      %v490 = vld [vmem:[%s426 + $0x100] sm:$0xff]
      %v491 = vld [vmem:[%s426 + $0x108] sm:$0xff]
      %v492 = vld [vmem:[%s426 + $0x110] sm:$0xff]
      %v493 = vld [vmem:[%s426 + $0x118] sm:$0xff]
      %v494 = vld [vmem:[%s426 + $0x120] sm:$0xff]
      %v495 = vld [vmem:[%s426 + $0x128] sm:$0xff]
      %v496 = vld [vmem:[%s426 + $0x130] sm:$0xff]
      %v497 = vld [vmem:[%s426 + $0x138] sm:$0xff]
      %v498 = vld [vmem:[%s426 + $0x140] sm:$0xff]
      %v499 = vld [vmem:[%s426 + $0x148] sm:$0xff]
      %v500 = vld [vmem:[%s426 + $0x150] sm:$0xff]
      %v501 = vld [vmem:[%s426 + $0x158] sm:$0xff]
      %v502 = vld [vmem:[%s426 + $0x160] sm:$0xff]
      %v503 = vld [vmem:[%s426 + $0x168] sm:$0xff]
      %v504 = vld [vmem:[%s426 + $0x170] sm:$0xff]
      %v505 = vld [vmem:[%s426 + $0x178] sm:$0xff]
      %v506 = vld [vmem:[%s426 + $0x180] sm:$0xff]
      %v507 = vld [vmem:[%s426 + $0x188] sm:$0xff]
      %v508 = vld [vmem:[%s426 + $0x190] sm:$0xff]
      %v509 = vld [vmem:[%s426 + $0x198] sm:$0xff]
      %v510 = vld [vmem:[%s426 + $0x1a0] sm:$0xff]
      %v511 = vld [vmem:[%s426 + $0x1a8] sm:$0xff]
      %v512 = vld [vmem:[%s426 + $0x1b0] sm:$0xff]
      %v513 = vld [vmem:[%s426 + $0x1b8] sm:$0xff]
      %v514 = vld [vmem:[%s426 + $0x1c0] sm:$0xff]
      %v515 = vld [vmem:[%s426 + $0x1c8] sm:$0xff]
      %v516 = vld [vmem:[%s426 + $0x1d0] sm:$0xff]
      %v517 = vld [vmem:[%s426 + $0x1d8] sm:$0xff]
      %v518 = vld [vmem:[%s426 + $0x1e0] sm:$0xff]
      %v519 = vld [vmem:[%s426 + $0x1e8] sm:$0xff]
      %v520 = vld [vmem:[%s426 + $0x1f0] sm:$0xff]
      %v521 = vld [vmem:[%s426 + $0x1f8] sm:$0xff]
      %v522 = vld [vmem:[%s1] sm:$0xff]
      %v523 = vld [vmem:[%s1 + $0x8] sm:$0xff]
      %v524 = vld [vmem:[%s1 + $0x10] sm:$0xff]
      %526 = vset.pattern.permute.xlu0 0
      %527 = vperm.xlu0 %526, %v522
      %v528 = vpop.permute.xlu0 %527
      %531 = vset.pattern.permute.xlu0 0
      %532 = vperm.xlu0 %531, %v523
      %v533 = vpop.permute.xlu0 %532
      %536 = vset.pattern.permute.xlu0 0
      %537 = vperm.xlu0 %536, %v524
      %v538 = vpop.permute.xlu0 %537
      %540 = vmatprep.subr.mxu0 %v459
      %541 = vmatpush1.msra.mxu0 %v458
      %542 = vmatprep.subr.mxu0 %v461
      %543 = vmatpush1.msra.mxu0 %v460
      %544 = vmatprep.subr.mxu0 %v463
      %545 = vmatpush1.msra.mxu0 %v462
      %546 = vmatprep.subr.mxu0 %v465
      %547 = vmatpush1.msra.mxu0 %v464
      %548 = vmatprep.subr.mxu0 %v467
      %549 = vmatpush1.msra.mxu0 %v466
      %550 = vmatprep.subr.mxu0 %v469
      %551 = vmatpush1.msra.mxu0 %v468
      %552 = vmatprep.subr.mxu0 %v471
      %553 = vmatpush1.msra.mxu0 %v470
      %554 = vmatprep.subr.mxu0 %v473
      %555 = vmatpush1.msra.mxu0 %v472
      %556 = vmatprep.subr.mxu0 %v475
      %557 = vmatpush1.msra.mxu0 %v474
      %558 = vmatprep.subr.mxu0 %v477
      %559 = vmatpush1.msra.mxu0 %v476
      %560 = vmatprep.subr.mxu0 %v479
      %561 = vmatpush1.msra.mxu0 %v478
      %562 = vmatprep.subr.mxu0 %v481
      %563 = vmatpush1.msra.mxu0 %v480
      %564 = vmatprep.subr.mxu0 %v483
      %565 = vmatpush1.msra.mxu0 %v482
      %566 = vmatprep.subr.mxu0 %v485
      %567 = vmatpush1.msra.mxu0 %v484
      %568 = vmatprep.subr.mxu0 %v487
      %569 = vmatpush1.msra.mxu0 %v486
      %570 = vmatprep.subr.mxu0 %v489
      %571 = vmatpush1.msra.mxu0 %v488
      %572 = vmatprep.subr.mxu0 %v491
      %573 = vmatpush1.msra.mxu0 %v490
      %574 = vmatprep.subr.mxu0 %v493
      %575 = vmatpush1.msra.mxu0 %v492
      %576 = vmatprep.subr.mxu0 %v495
      %577 = vmatpush1.msra.mxu0 %v494
      %578 = vmatprep.subr.mxu0 %v497
      %579 = vmatpush1.msra.mxu0 %v496
      %580 = vmatprep.subr.mxu0 %v499
      %581 = vmatpush1.msra.mxu0 %v498
      %582 = vmatprep.subr.mxu0 %v501
      %583 = vmatpush1.msra.mxu0 %v500
      %584 = vmatprep.subr.mxu0 %v503
      %585 = vmatpush1.msra.mxu0 %v502
      %586 = vmatprep.subr.mxu0 %v505
      %587 = vmatpush1.msra.mxu0 %v504
      %588 = vmatprep.subr.mxu0 %v507
      %589 = vmatpush1.msra.mxu0 %v506
      %590 = vmatprep.subr.mxu0 %v509
      %591 = vmatpush1.msra.mxu0 %v508
      %592 = vmatprep.subr.mxu0 %v511
      %593 = vmatpush1.msra.mxu0 %v510
      %594 = vmatprep.subr.mxu0 %v513
      %595 = vmatpush1.msra.mxu0 %v512
      %596 = vmatprep.subr.mxu0 %v515
      %597 = vmatpush1.msra.mxu0 %v514
      %598 = vmatprep.subr.mxu0 %v517
      %599 = vmatpush1.msra.mxu0 %v516
      %600 = vmatprep.subr.mxu0 %v519
      %601 = vmatpush1.msra.mxu0 %v518
      %602 = vmatprep.subr.mxu0 %v521
      %603 = vmatpush1.msra.mxu0 %v520
      %604 = vmatprep.mubr.f32.mxu0 %v453
      %605 = vmatmul.mubr.f32.gmra.mrb[0].mxu0 %v452
      %v606 = vpop.f32.mrb[0].mxu0
      %v607 = vadd.f32 %v528, %v606
      %v608 = vpop.f32.mrb[0].mxu0
      %v609 = vadd.f32 %v528, %v608
      %610 = vmatprep.mubr.f32.mxu0 %v455
      %611 = vmatmul.mubr.f32.gmra.mrb[0].mxu0 %v454
      %v612 = vpop.f32.mrb[0].mxu0
      %v613 = vadd.f32 %v533, %v612
      %v614 = vpop.f32.mrb[0].mxu0
      %v615 = vadd.f32 %v533, %v614
      %616 = vmatprep.mubr.f32.mxu0 %v457
      %617 = vmatmul.mubr.f32.gmra.mrb[0].mxu0 %v456
      %v618 = vpop.f32.mrb[0].mxu0
      %v619 = vadd.f32 %v538, %v618
      %v620 = vpop.f32.mrb[0].mxu0
      %v621 = vadd.f32 %v538, %v620
      %622 = vdwg.mxu0
      %623 = vst [vmem:[%s441] sm:$0xff] %v607
      %624 = vst [vmem:[%s441 + $0x8] sm:$0xff] %v609
      %625 = vst [vmem:[%s441 + $0x10] sm:$0xff] %v613
      %626 = vst [vmem:[%s441 + $0x18] sm:$0xff] %v615
      %627 = vst [vmem:[%s441 + $0x20] sm:$0xff] %v619
      %628 = vst [vmem:[%s441 + $0x28] sm:$0xff] %v621
      %v629 = vld [vmem:[%s2] sm:$0xff]
      %v630 = vld [vmem:[%s2 + $0x8] sm:$0xff]
      %v631 = vld [vmem:[%s2 + $0x10] sm:$0xff]
      %v632 = vld [vmem:[%s2 + $0x18] sm:$0xff]
      %v633 = vld [vmem:[%s2 + $0x20] sm:$0xff]
      %v634 = vld [vmem:[%s2 + $0x28] sm:$0xff]
      %v635 = vld [vmem:[%s2 + $0x30] sm:$0xff]
      %v636 = vld [vmem:[%s2 + $0x38] sm:$0xff]
      %v637 = vld [vmem:[%s2 + $0x40] sm:$0xff]
      %v638 = vld [vmem:[%s2 + $0x48] sm:$0xff]
      %v639 = vld [vmem:[%s2 + $0x50] sm:$0xff]
      %v640 = vld [vmem:[%s2 + $0x58] sm:$0xff]
      %v641 = vld [vmem:[%s431] sm:$0xff]
      %v642 = vld [vmem:[%s431 + $0x8] sm:$0xff]
      %v643 = vld [vmem:[%s431 + $0x10] sm:$0xff]
      %v644 = vld [vmem:[%s431 + $0x18] sm:$0xff]
      %v645 = vld [vmem:[%s431 + $0x20] sm:$0xff]
      %v646 = vld [vmem:[%s431 + $0x28] sm:$0xff]
      %v647 = vld [vmem:[%s431 + $0x30] sm:$0xff]
      %v648 = vld [vmem:[%s431 + $0x38] sm:$0xff]
      %v649 = vld [vmem:[%s431 + $0x40] sm:$0xff]
      %v650 = vld [vmem:[%s431 + $0x48] sm:$0xff]
      %v651 = vld [vmem:[%s431 + $0x50] sm:$0xff]
      %v652 = vld [vmem:[%s431 + $0x58] sm:$0xff]
      %v653 = vld [vmem:[%s431 + $0x60] sm:$0xff]
      %v654 = vld [vmem:[%s431 + $0x68] sm:$0xff]
      %v655 = vld [vmem:[%s431 + $0x70] sm:$0xff]
      %v656 = vld [vmem:[%s431 + $0x78] sm:$0xff]
      %v657 = vld [vmem:[%s431 + $0x80] sm:$0xff]
      %v658 = vld [vmem:[%s431 + $0x88] sm:$0xff]
      %v659 = vld [vmem:[%s431 + $0x90] sm:$0xff]
      %v660 = vld [vmem:[%s431 + $0x98] sm:$0xff]
      %v661 = vld [vmem:[%s431 + $0xa0] sm:$0xff]
      %v662 = vld [vmem:[%s431 + $0xa8] sm:$0xff]
      %v663 = vld [vmem:[%s431 + $0xb0] sm:$0xff]
      %v664 = vld [vmem:[%s431 + $0xb8] sm:$0xff]
      %v665 = vld [vmem:[%s431 + $0xc0] sm:$0xff]
      %v666 = vld [vmem:[%s431 + $0xc8] sm:$0xff]
      %v667 = vld [vmem:[%s431 + $0xd0] sm:$0xff]
      %v668 = vld [vmem:[%s431 + $0xd8] sm:$0xff]
      %v669 = vld [vmem:[%s431 + $0xe0] sm:$0xff]
      %v670 = vld [vmem:[%s431 + $0xe8] sm:$0xff]
      %v671 = vld [vmem:[%s431 + $0xf0] sm:$0xff]
      %v672 = vld [vmem:[%s431 + $0xf8] sm:$0xff]
      %v673 = vld [vmem:[%s431 + $0x100] sm:$0xff]
      %v674 = vld [vmem:[%s431 + $0x108] sm:$0xff]
      %v675 = vld [vmem:[%s431 + $0x110] sm:$0xff]
      %v676 = vld [vmem:[%s431 + $0x118] sm:$0xff]
      %v677 = vld [vmem:[%s431 + $0x120] sm:$0xff]
      %v678 = vld [vmem:[%s431 + $0x128] sm:$0xff]
      %v679 = vld [vmem:[%s431 + $0x130] sm:$0xff]
      %v680 = vld [vmem:[%s431 + $0x138] sm:$0xff]
      %v681 = vld [vmem:[%s431 + $0x140] sm:$0xff]
      %v682 = vld [vmem:[%s431 + $0x148] sm:$0xff]
      %v683 = vld [vmem:[%s431 + $0x150] sm:$0xff]
      %v684 = vld [vmem:[%s431 + $0x158] sm:$0xff]
      %v685 = vld [vmem:[%s431 + $0x160] sm:$0xff]
      %v686 = vld [vmem:[%s431 + $0x168] sm:$0xff]
      %v687 = vld [vmem:[%s431 + $0x170] sm:$0xff]
      %v688 = vld [vmem:[%s431 + $0x178] sm:$0xff]
      %v689 = vld [vmem:[%s431 + $0x180] sm:$0xff]
      %v690 = vld [vmem:[%s431 + $0x188] sm:$0xff]
      %v691 = vld [vmem:[%s431 + $0x190] sm:$0xff]
      %v692 = vld [vmem:[%s431 + $0x198] sm:$0xff]
      %v693 = vld [vmem:[%s431 + $0x1a0] sm:$0xff]
      %v694 = vld [vmem:[%s431 + $0x1a8] sm:$0xff]
      %v695 = vld [vmem:[%s431 + $0x1b0] sm:$0xff]
      %v696 = vld [vmem:[%s431 + $0x1b8] sm:$0xff]
      %v697 = vld [vmem:[%s431 + $0x1c0] sm:$0xff]
      %v698 = vld [vmem:[%s431 + $0x1c8] sm:$0xff]
      %v699 = vld [vmem:[%s431 + $0x1d0] sm:$0xff]
      %v700 = vld [vmem:[%s431 + $0x1d8] sm:$0xff]
      %v701 = vld [vmem:[%s431 + $0x1e0] sm:$0xff]
      %v702 = vld [vmem:[%s431 + $0x1e8] sm:$0xff]
      %v703 = vld [vmem:[%s431 + $0x1f0] sm:$0xff]
      %v704 = vld [vmem:[%s431 + $0x1f8] sm:$0xff]
      %v705 = vld [vmem:[%s3] sm:$0xff]
      %v706 = vld [vmem:[%s3 + $0x8] sm:$0xff]
      %v707 = vld [vmem:[%s3 + $0x10] sm:$0xff]
      %709 = vset.pattern.permute.xlu0 0
      %710 = vperm.xlu0 %709, %v705
      %v711 = vpop.permute.xlu0 %710
      %714 = vset.pattern.permute.xlu0 0
      %715 = vperm.xlu0 %714, %v706
      %v716 = vpop.permute.xlu0 %715
      %719 = vset.pattern.permute.xlu0 0
      %720 = vperm.xlu0 %719, %v707
      %v721 = vpop.permute.xlu0 %720
      %723 = vmatprep.subr.mxu0 0.0
      %724 = vmatpush1.msra.mxu0 %v641
      %725 = vmatprep.subr.mxu0 0.0
      %726 = vmatpush1.msra.mxu0 %v642
      %727 = vmatprep.subr.mxu0 0.0
      %728 = vmatpush1.msra.mxu0 %v643
      %729 = vmatprep.subr.mxu0 0.0
      %730 = vmatpush1.msra.mxu0 %v644
      %731 = vmatprep.subr.mxu0 0.0
      %732 = vmatpush1.msra.mxu0 %v645
      %733 = vmatprep.subr.mxu0 0.0
      %734 = vmatpush1.msra.mxu0 %v646
      %735 = vmatprep.subr.mxu0 0.0
      %736 = vmatpush1.msra.mxu0 %v647
      %737 = vmatprep.subr.mxu0 0.0
      %738 = vmatpush1.msra.mxu0 %v648
      %739 = vmatprep.subr.mxu0 0.0
      %740 = vmatpush1.msra.mxu0 %v649
      %741 = vmatprep.subr.mxu0 0.0
      %742 = vmatpush1.msra.mxu0 %v650
      %743 = vmatprep.subr.mxu0 0.0
      %744 = vmatpush1.msra.mxu0 %v651
      %745 = vmatprep.subr.mxu0 0.0
      %746 = vmatpush1.msra.mxu0 %v652
      %747 = vmatprep.subr.mxu0 0.0
      %748 = vmatpush1.msra.mxu0 %v653
      %749 = vmatprep.subr.mxu0 0.0
      %750 = vmatpush1.msra.mxu0 %v654
      %751 = vmatprep.subr.mxu0 0.0
      %752 = vmatpush1.msra.mxu0 %v655
      %753 = vmatprep.subr.mxu0 0.0
      %754 = vmatpush1.msra.mxu0 %v656
      %755 = vmatprep.subr.mxu0 0.0
      %756 = vmatpush1.msra.mxu0 %v657
      %757 = vmatprep.subr.mxu0 0.0
      %758 = vmatpush1.msra.mxu0 %v658
      %759 = vmatprep.subr.mxu0 0.0
      %760 = vmatpush1.msra.mxu0 %v659
      %761 = vmatprep.subr.mxu0 0.0
      %762 = vmatpush1.msra.mxu0 %v660
      %763 = vmatprep.subr.mxu0 0.0
      %764 = vmatpush1.msra.mxu0 %v661
      %765 = vmatprep.subr.mxu0 0.0
      %766 = vmatpush1.msra.mxu0 %v662
      %767 = vmatprep.subr.mxu0 0.0
      %768 = vmatpush1.msra.mxu0 %v663
      %769 = vmatprep.subr.mxu0 0.0
      %770 = vmatpush1.msra.mxu0 %v664
      %771 = vmatprep.subr.mxu0 0.0
      %772 = vmatpush1.msra.mxu0 %v665
      %773 = vmatprep.subr.mxu0 0.0
      %774 = vmatpush1.msra.mxu0 %v666
      %775 = vmatprep.subr.mxu0 0.0
      %776 = vmatpush1.msra.mxu0 %v667
      %777 = vmatprep.subr.mxu0 0.0
      %778 = vmatpush1.msra.mxu0 %v668
      %779 = vmatprep.subr.mxu0 0.0
      %780 = vmatpush1.msra.mxu0 %v669
      %781 = vmatprep.subr.mxu0 0.0
      %782 = vmatpush1.msra.mxu0 %v670
      %783 = vmatprep.subr.mxu0 0.0
      %784 = vmatpush1.msra.mxu0 %v671
      %785 = vmatprep.subr.mxu0 0.0
      %786 = vmatpush1.msra.mxu0 %v672
      %787 = vmatprep.mubr.f32.mxu0 %v630
      %788 = vmatmul.mubr.f32.gmra.mrb[0].mxu0 %v629
      %v789 = vpop.f32.mrb[0].mxu0
      %v790 = vadd.f32 %v711, %v789
      %v791 = vpop.f32.mrb[0].mxu0
      %792 = vmatprep.mubr.f32.mxu0 %v634
      %793 = vmatmul.mubr.f32.gmra.mrb[0].mxu0 %v633
      %v794 = vpop.f32.mrb[0].mxu0
      %v795 = vadd.f32 %v716, %v794
      %v796 = vpop.f32.mrb[0].mxu0
      %797 = vmatprep.mubr.f32.mxu0 %v638
      %798 = vmatmul.mubr.f32.gmra.mrb[0].mxu0 %v637
      %v799 = vpop.f32.mrb[0].mxu0
      %v800 = vadd.f32 %v721, %v799
      %v801 = vpop.f32.mrb[0].mxu0
      %802 = vdwg.mxu0
      %803 = vmatprep.subr.mxu0 0.0
      %804 = vmatpush1.msra.mxu0 %v673
      %805 = vmatprep.subr.mxu0 0.0
      %806 = vmatpush1.msra.mxu0 %v674
      %807 = vmatprep.subr.mxu0 0.0
      %808 = vmatpush1.msra.mxu0 %v675
      %809 = vmatprep.subr.mxu0 0.0
      %810 = vmatpush1.msra.mxu0 %v676
      %811 = vmatprep.subr.mxu0 0.0
      %812 = vmatpush1.msra.mxu0 %v677
      %813 = vmatprep.subr.mxu0 0.0
      %814 = vmatpush1.msra.mxu0 %v678
      %815 = vmatprep.subr.mxu0 0.0
      %816 = vmatpush1.msra.mxu0 %v679
      %817 = vmatprep.subr.mxu0 0.0
      %818 = vmatpush1.msra.mxu0 %v680
      %819 = vmatprep.subr.mxu0 0.0
      %820 = vmatpush1.msra.mxu0 %v681
      %821 = vmatprep.subr.mxu0 0.0
      %822 = vmatpush1.msra.mxu0 %v682
      %823 = vmatprep.subr.mxu0 0.0
      %824 = vmatpush1.msra.mxu0 %v683
      %825 = vmatprep.subr.mxu0 0.0
      %826 = vmatpush1.msra.mxu0 %v684
      %827 = vmatprep.subr.mxu0 0.0
      %828 = vmatpush1.msra.mxu0 %v685
      %829 = vmatprep.subr.mxu0 0.0
      %830 = vmatpush1.msra.mxu0 %v686
      %831 = vmatprep.subr.mxu0 0.0
      %832 = vmatpush1.msra.mxu0 %v687
      %833 = vmatprep.subr.mxu0 0.0
      %834 = vmatpush1.msra.mxu0 %v688
      %835 = vmatprep.subr.mxu0 0.0
      %836 = vmatpush1.msra.mxu0 %v689
      %837 = vmatprep.subr.mxu0 0.0
      %838 = vmatpush1.msra.mxu0 %v690
      %839 = vmatprep.subr.mxu0 0.0
      %840 = vmatpush1.msra.mxu0 %v691
      %841 = vmatprep.subr.mxu0 0.0
      %842 = vmatpush1.msra.mxu0 %v692
      %843 = vmatprep.subr.mxu0 0.0
      %844 = vmatpush1.msra.mxu0 %v693
      %845 = vmatprep.subr.mxu0 0.0
      %846 = vmatpush1.msra.mxu0 %v694
      %847 = vmatprep.subr.mxu0 0.0
      %848 = vmatpush1.msra.mxu0 %v695
      %849 = vmatprep.subr.mxu0 0.0
      %850 = vmatpush1.msra.mxu0 %v696
      %851 = vmatprep.subr.mxu0 0.0
      %852 = vmatpush1.msra.mxu0 %v697
      %853 = vmatprep.subr.mxu0 0.0
      %854 = vmatpush1.msra.mxu0 %v698
      %855 = vmatprep.subr.mxu0 0.0
      %856 = vmatpush1.msra.mxu0 %v699
      %857 = vmatprep.subr.mxu0 0.0
      %858 = vmatpush1.msra.mxu0 %v700
      %859 = vmatprep.subr.mxu0 0.0
      %860 = vmatpush1.msra.mxu0 %v701
      %861 = vmatprep.subr.mxu0 0.0
      %862 = vmatpush1.msra.mxu0 %v702
      %863 = vmatprep.subr.mxu0 0.0
      %864 = vmatpush1.msra.mxu0 %v703
      %865 = vmatprep.subr.mxu0 0.0
      %866 = vmatpush1.msra.mxu0 %v704
      %867 = vmatprep.mubr.f32.mxu0 %v632
      %868 = vmatmul.mubr.f32.gmra.mrb[0].mxu0 %v631
      %v869 = vpop.f32.mrb[0].mxu0
      %v870 = vadd.f32 %v790, %v869
      %v871 = vpop.f32.mrb[0].mxu0
      %872 = vmatprep.mubr.f32.mxu0 %v636
      %873 = vmatmul.mubr.f32.gmra.mrb[0].mxu0 %v635
      %v874 = vpop.f32.mrb[0].mxu0
      %v875 = vadd.f32 %v795, %v874
      %v876 = vpop.f32.mrb[0].mxu0
      %877 = vmatprep.mubr.f32.mxu0 %v640
      %878 = vmatmul.mubr.f32.gmra.mrb[0].mxu0 %v639
      %v879 = vpop.f32.mrb[0].mxu0
      %v880 = vadd.f32 %v800, %v879
      %v881 = vpop.f32.mrb[0].mxu0
      %882 = vdwg.mxu0
      %vm883 = vcmask 523264
      %884 = vst.msk [vmem:[%s446] sm:$0xff] %vm883, %v870
      %885 = vst.msk [vmem:[%s446 + $0x8] sm:$0xff] %vm883, %v875
      %886 = vst.msk [vmem:[%s446 + $0x10] sm:$0xff] %vm883, %v880
      %v887 = vld [vmem:[%s4] sm:$0xff]
      %v888 = vld [vmem:[%s4 + $0x8] sm:$0xff]
      %v889 = vld [vmem:[%s4 + $0x10] sm:$0xff]
      %v890 = vld [vmem:[%s4 + $0x18] sm:$0xff]
      %v891 = vld [vmem:[%s4 + $0x20] sm:$0xff]
      %v892 = vld [vmem:[%s4 + $0x28] sm:$0xff]
      %v893 = vld [vmem:[%s4 + $0x30] sm:$0xff]
      %v894 = vld [vmem:[%s4 + $0x38] sm:$0xff]
      %v895 = vld [vmem:[%s4 + $0x40] sm:$0xff]
      %v896 = vld [vmem:[%s4 + $0x48] sm:$0xff]
      %v897 = vld [vmem:[%s4 + $0x50] sm:$0xff]
      %v898 = vld [vmem:[%s4 + $0x58] sm:$0xff]
      %v899 = vld [vmem:[%s4 + $0x60] sm:$0xff]
      %v900 = vld [vmem:[%s4 + $0x68] sm:$0xff]
      %v901 = vld [vmem:[%s4 + $0x70] sm:$0xff]
      %v902 = vld [vmem:[%s4 + $0x78] sm:$0xff]
      %v903 = vld [vmem:[%s4 + $0x80] sm:$0xff]
      %v904 = vld [vmem:[%s4 + $0x88] sm:$0xff]
      %v905 = vld [vmem:[%s4 + $0x90] sm:$0xff]
      %v906 = vld [vmem:[%s4 + $0x98] sm:$0xff]
      %v907 = vld [vmem:[%s4 + $0xa0] sm:$0xff]
      %v908 = vld [vmem:[%s4 + $0xa8] sm:$0xff]
      %v909 = vld [vmem:[%s4 + $0xb0] sm:$0xff]
      %v910 = vld [vmem:[%s4 + $0xb8] sm:$0xff]
      %v911 = vld [vmem:[%s436] sm:$0xff]
      %v912 = vld [vmem:[%s436 + $0x8] sm:$0xff]
      %v913 = vld [vmem:[%s436 + $0x10] sm:$0xff]
      %v914 = vld [vmem:[%s436 + $0x18] sm:$0xff]
      %v915 = vld [vmem:[%s436 + $0x20] sm:$0xff]
      %v916 = vld [vmem:[%s436 + $0x28] sm:$0xff]
      %v917 = vld [vmem:[%s436 + $0x30] sm:$0xff]
      %v918 = vld [vmem:[%s436 + $0x38] sm:$0xff]
      %v919 = vld [vmem:[%s436 + $0x40] sm:$0xff]
      %v920 = vld [vmem:[%s436 + $0x48] sm:$0xff]
      %v921 = vld [vmem:[%s436 + $0x50] sm:$0xff]
      %v922 = vld [vmem:[%s436 + $0x58] sm:$0xff]
      %v923 = vld [vmem:[%s436 + $0x60] sm:$0xff]
      %v924 = vld [vmem:[%s436 + $0x68] sm:$0xff]
      %v925 = vld [vmem:[%s436 + $0x70] sm:$0xff]
      %v926 = vld [vmem:[%s436 + $0x78] sm:$0xff]
      %v927 = vld [vmem:[%s436 + $0x80] sm:$0xff]
      %v928 = vld [vmem:[%s436 + $0x88] sm:$0xff]
      %v929 = vld [vmem:[%s436 + $0x90] sm:$0xff]
      %v930 = vld [vmem:[%s436 + $0x98] sm:$0xff]
      %v931 = vld [vmem:[%s436 + $0xa0] sm:$0xff]
      %v932 = vld [vmem:[%s436 + $0xa8] sm:$0xff]
      %v933 = vld [vmem:[%s436 + $0xb0] sm:$0xff]
      %v934 = vld [vmem:[%s436 + $0xb8] sm:$0xff]
      %v935 = vld [vmem:[%s436 + $0xc0] sm:$0xff]
      %v936 = vld [vmem:[%s436 + $0xc8] sm:$0xff]
      %v937 = vld [vmem:[%s436 + $0xd0] sm:$0xff]
      %v938 = vld [vmem:[%s436 + $0xd8] sm:$0xff]
      %v939 = vld [vmem:[%s436 + $0xe0] sm:$0xff]
      %v940 = vld [vmem:[%s436 + $0xe8] sm:$0xff]
      %v941 = vld [vmem:[%s436 + $0xf0] sm:$0xff]
      %v942 = vld [vmem:[%s436 + $0xf8] sm:$0xff]
      %v943 = vld [vmem:[%s436 + $0x100] sm:$0xff]
      %v944 = vld [vmem:[%s436 + $0x108] sm:$0xff]
      %v945 = vld [vmem:[%s436 + $0x110] sm:$0xff]
      %v946 = vld [vmem:[%s436 + $0x118] sm:$0xff]
      %v947 = vld [vmem:[%s436 + $0x120] sm:$0xff]
      %v948 = vld [vmem:[%s436 + $0x128] sm:$0xff]
      %v949 = vld [vmem:[%s436 + $0x130] sm:$0xff]
      %v950 = vld [vmem:[%s436 + $0x138] sm:$0xff]
      %v951 = vld [vmem:[%s436 + $0x140] sm:$0xff]
      %v952 = vld [vmem:[%s436 + $0x148] sm:$0xff]
      %v953 = vld [vmem:[%s436 + $0x150] sm:$0xff]
      %v954 = vld [vmem:[%s436 + $0x158] sm:$0xff]
      %v955 = vld [vmem:[%s436 + $0x160] sm:$0xff]
      %v956 = vld [vmem:[%s436 + $0x168] sm:$0xff]
      %v957 = vld [vmem:[%s436 + $0x170] sm:$0xff]
      %v958 = vld [vmem:[%s436 + $0x178] sm:$0xff]
      %v959 = vld [vmem:[%s436 + $0x180] sm:$0xff]
      %v960 = vld [vmem:[%s436 + $0x188] sm:$0xff]
      %v961 = vld [vmem:[%s436 + $0x190] sm:$0xff]
      %v962 = vld [vmem:[%s436 + $0x198] sm:$0xff]
      %v963 = vld [vmem:[%s436 + $0x1a0] sm:$0xff]
      %v964 = vld [vmem:[%s436 + $0x1a8] sm:$0xff]
      %v965 = vld [vmem:[%s436 + $0x1b0] sm:$0xff]
      %v966 = vld [vmem:[%s436 + $0x1b8] sm:$0xff]
      %v967 = vld [vmem:[%s436 + $0x1c0] sm:$0xff]
      %v968 = vld [vmem:[%s436 + $0x1c8] sm:$0xff]
      %v969 = vld [vmem:[%s436 + $0x1d0] sm:$0xff]
      %v970 = vld [vmem:[%s436 + $0x1d8] sm:$0xff]
      %v971 = vld [vmem:[%s436 + $0x1e0] sm:$0xff]
      %v972 = vld [vmem:[%s436 + $0x1e8] sm:$0xff]
      %v973 = vld [vmem:[%s436 + $0x1f0] sm:$0xff]
      %v974 = vld [vmem:[%s436 + $0x1f8] sm:$0xff]
      %v975 = vld [vmem:[%s436 + $0x200] sm:$0xff]
      %v976 = vld [vmem:[%s436 + $0x208] sm:$0xff]
      %v977 = vld [vmem:[%s436 + $0x210] sm:$0xff]
      %v978 = vld [vmem:[%s436 + $0x218] sm:$0xff]
      %v979 = vld [vmem:[%s436 + $0x220] sm:$0xff]
      %v980 = vld [vmem:[%s436 + $0x228] sm:$0xff]
      %v981 = vld [vmem:[%s436 + $0x230] sm:$0xff]
      %v982 = vld [vmem:[%s436 + $0x238] sm:$0xff]
      %v983 = vld [vmem:[%s436 + $0x240] sm:$0xff]
      %v984 = vld [vmem:[%s436 + $0x248] sm:$0xff]
      %v985 = vld [vmem:[%s436 + $0x250] sm:$0xff]
      %v986 = vld [vmem:[%s436 + $0x258] sm:$0xff]
      %v987 = vld [vmem:[%s436 + $0x260] sm:$0xff]
      %v988 = vld [vmem:[%s436 + $0x268] sm:$0xff]
      %v989 = vld [vmem:[%s436 + $0x270] sm:$0xff]
      %v990 = vld [vmem:[%s436 + $0x278] sm:$0xff]
      %v991 = vld [vmem:[%s436 + $0x280] sm:$0xff]
      %v992 = vld [vmem:[%s436 + $0x288] sm:$0xff]
      %v993 = vld [vmem:[%s436 + $0x290] sm:$0xff]
      %v994 = vld [vmem:[%s436 + $0x298] sm:$0xff]
      %v995 = vld [vmem:[%s436 + $0x2a0] sm:$0xff]
      %v996 = vld [vmem:[%s436 + $0x2a8] sm:$0xff]
      %v997 = vld [vmem:[%s436 + $0x2b0] sm:$0xff]
      %v998 = vld [vmem:[%s436 + $0x2b8] sm:$0xff]
      %v999 = vld [vmem:[%s436 + $0x2c0] sm:$0xff]
      %v1000 = vld [vmem:[%s436 + $0x2c8] sm:$0xff]
      %v1001 = vld [vmem:[%s436 + $0x2d0] sm:$0xff]
      %v1002 = vld [vmem:[%s436 + $0x2d8] sm:$0xff]
      %v1003 = vld [vmem:[%s436 + $0x2e0] sm:$0xff]
      %v1004 = vld [vmem:[%s436 + $0x2e8] sm:$0xff]
      %v1005 = vld [vmem:[%s436 + $0x2f0] sm:$0xff]
      %v1006 = vld [vmem:[%s436 + $0x2f8] sm:$0xff]
      %v1007 = vld [vmem:[%s436 + $0x300] sm:$0xff]
      %v1008 = vld [vmem:[%s436 + $0x308] sm:$0xff]
      %v1009 = vld [vmem:[%s436 + $0x310] sm:$0xff]
      %v1010 = vld [vmem:[%s436 + $0x318] sm:$0xff]
      %v1011 = vld [vmem:[%s436 + $0x320] sm:$0xff]
      %v1012 = vld [vmem:[%s436 + $0x328] sm:$0xff]
      %v1013 = vld [vmem:[%s436 + $0x330] sm:$0xff]
      %v1014 = vld [vmem:[%s436 + $0x338] sm:$0xff]
      %v1015 = vld [vmem:[%s436 + $0x340] sm:$0xff]
      %v1016 = vld [vmem:[%s436 + $0x348] sm:$0xff]
      %v1017 = vld [vmem:[%s436 + $0x350] sm:$0xff]
      %v1018 = vld [vmem:[%s436 + $0x358] sm:$0xff]
      %v1019 = vld [vmem:[%s436 + $0x360] sm:$0xff]
      %v1020 = vld [vmem:[%s436 + $0x368] sm:$0xff]
      %v1021 = vld [vmem:[%s436 + $0x370] sm:$0xff]
      %v1022 = vld [vmem:[%s436 + $0x378] sm:$0xff]
      %v1023 = vld [vmem:[%s436 + $0x380] sm:$0xff]
      %v1024 = vld [vmem:[%s436 + $0x388] sm:$0xff]
      %v1025 = vld [vmem:[%s436 + $0x390] sm:$0xff]
      %v1026 = vld [vmem:[%s436 + $0x398] sm:$0xff]
      %v1027 = vld [vmem:[%s436 + $0x3a0] sm:$0xff]
      %v1028 = vld [vmem:[%s436 + $0x3a8] sm:$0xff]
      %v1029 = vld [vmem:[%s436 + $0x3b0] sm:$0xff]
      %v1030 = vld [vmem:[%s436 + $0x3b8] sm:$0xff]
      %v1031 = vld [vmem:[%s436 + $0x3c0] sm:$0xff]
      %v1032 = vld [vmem:[%s436 + $0x3c8] sm:$0xff]
      %v1033 = vld [vmem:[%s436 + $0x3d0] sm:$0xff]
      %v1034 = vld [vmem:[%s436 + $0x3d8] sm:$0xff]
      %v1035 = vld [vmem:[%s436 + $0x3e0] sm:$0xff]
      %v1036 = vld [vmem:[%s436 + $0x3e8] sm:$0xff]
      %v1037 = vld [vmem:[%s436 + $0x3f0] sm:$0xff]
      %v1038 = vld [vmem:[%s436 + $0x3f8] sm:$0xff]
      %v1039 = vld [vmem:[%s5] sm:$0xff]
      %v1040 = vld [vmem:[%s5 + $0x8] sm:$0xff]
      %v1041 = vld [vmem:[%s5 + $0x10] sm:$0xff]
      %1043 = vset.pattern.permute.xlu0 0
      %1044 = vperm.xlu0 %1043, %v1039
      %v1045 = vpop.permute.xlu0 %1044
      %1048 = vset.pattern.permute.xlu0 0
      %1049 = vperm.xlu0 %1048, %v1040
      %v1050 = vpop.permute.xlu0 %1049
      %1053 = vset.pattern.permute.xlu0 0
      %1054 = vperm.xlu0 %1053, %v1041
      %v1055 = vpop.permute.xlu0 %1054
      %1057 = vmatprep.subr.mxu0 0.0
      %1058 = vmatpush1.msra.mxu0 %v911
      %1059 = vmatprep.subr.mxu0 0.0
      %1060 = vmatpush1.msra.mxu0 %v912
      %1061 = vmatprep.subr.mxu0 0.0
      %1062 = vmatpush1.msra.mxu0 %v913
      %1063 = vmatprep.subr.mxu0 0.0
      %1064 = vmatpush1.msra.mxu0 %v914
      %1065 = vmatprep.subr.mxu0 0.0
      %1066 = vmatpush1.msra.mxu0 %v915
      %1067 = vmatprep.subr.mxu0 0.0
      %1068 = vmatpush1.msra.mxu0 %v916
      %1069 = vmatprep.subr.mxu0 0.0
      %1070 = vmatpush1.msra.mxu0 %v917
      %1071 = vmatprep.subr.mxu0 0.0
      %1072 = vmatpush1.msra.mxu0 %v918
      %1073 = vmatprep.subr.mxu0 0.0
      %1074 = vmatpush1.msra.mxu0 %v919
      %1075 = vmatprep.subr.mxu0 0.0
      %1076 = vmatpush1.msra.mxu0 %v920
      %1077 = vmatprep.subr.mxu0 0.0
      %1078 = vmatpush1.msra.mxu0 %v921
      %1079 = vmatprep.subr.mxu0 0.0
      %1080 = vmatpush1.msra.mxu0 %v922
      %1081 = vmatprep.subr.mxu0 0.0
      %1082 = vmatpush1.msra.mxu0 %v923
      %1083 = vmatprep.subr.mxu0 0.0
      %1084 = vmatpush1.msra.mxu0 %v924
      %1085 = vmatprep.subr.mxu0 0.0
      %1086 = vmatpush1.msra.mxu0 %v925
      %1087 = vmatprep.subr.mxu0 0.0
      %1088 = vmatpush1.msra.mxu0 %v926
      %1089 = vmatprep.subr.mxu0 0.0
      %1090 = vmatpush1.msra.mxu0 %v927
      %1091 = vmatprep.subr.mxu0 0.0
      %1092 = vmatpush1.msra.mxu0 %v928
      %1093 = vmatprep.subr.mxu0 0.0
      %1094 = vmatpush1.msra.mxu0 %v929
      %1095 = vmatprep.subr.mxu0 0.0
      %1096 = vmatpush1.msra.mxu0 %v930
      %1097 = vmatprep.subr.mxu0 0.0
      %1098 = vmatpush1.msra.mxu0 %v931
      %1099 = vmatprep.subr.mxu0 0.0
      %1100 = vmatpush1.msra.mxu0 %v932
      %1101 = vmatprep.subr.mxu0 0.0
      %1102 = vmatpush1.msra.mxu0 %v933
      %1103 = vmatprep.subr.mxu0 0.0
      %1104 = vmatpush1.msra.mxu0 %v934
      %1105 = vmatprep.subr.mxu0 0.0
      %1106 = vmatpush1.msra.mxu0 %v935
      %1107 = vmatprep.subr.mxu0 0.0
      %1108 = vmatpush1.msra.mxu0 %v936
      %1109 = vmatprep.subr.mxu0 0.0
      %1110 = vmatpush1.msra.mxu0 %v937
      %1111 = vmatprep.subr.mxu0 0.0
      %1112 = vmatpush1.msra.mxu0 %v938
      %1113 = vmatprep.subr.mxu0 0.0
      %1114 = vmatpush1.msra.mxu0 %v939
      %1115 = vmatprep.subr.mxu0 0.0
      %1116 = vmatpush1.msra.mxu0 %v940
      %1117 = vmatprep.subr.mxu0 0.0
      %1118 = vmatpush1.msra.mxu0 %v941
      %1119 = vmatprep.subr.mxu0 0.0
      %1120 = vmatpush1.msra.mxu0 %v942
      %1121 = vmatprep.mubr.f32.mxu0 %v888
      %1122 = vmatmul.mubr.f32.gmra.mrb[0].mxu0 %v887
      %v1123 = vpop.f32.mrb[0].mxu0
      %v1124 = vadd.f32 %v1045, %v1123
      %v1125 = vpop.f32.mrb[0].mxu0
      %1126 = vmatprep.mubr.f32.mxu0 %v896
      %1127 = vmatmul.mubr.f32.gmra.mrb[0].mxu0 %v895
      %v1128 = vpop.f32.mrb[0].mxu0
      %v1129 = vadd.f32 %v1050, %v1128
      %v1130 = vpop.f32.mrb[0].mxu0
      %1131 = vmatprep.mubr.f32.mxu0 %v904
      %1132 = vmatmul.mubr.f32.gmra.mrb[0].mxu0 %v903
      %v1133 = vpop.f32.mrb[0].mxu0
      %v1134 = vadd.f32 %v1055, %v1133
      %v1135 = vpop.f32.mrb[0].mxu0
      %1136 = vdwg.mxu0
      %1137 = vmatprep.subr.mxu0 0.0
      %1138 = vmatpush1.msra.mxu0 %v943
      %1139 = vmatprep.subr.mxu0 0.0
      %1140 = vmatpush1.msra.mxu0 %v944
      %1141 = vmatprep.subr.mxu0 0.0
      %1142 = vmatpush1.msra.mxu0 %v945
      %1143 = vmatprep.subr.mxu0 0.0
      %1144 = vmatpush1.msra.mxu0 %v946
      %1145 = vmatprep.subr.mxu0 0.0
      %1146 = vmatpush1.msra.mxu0 %v947
      %1147 = vmatprep.subr.mxu0 0.0
      %1148 = vmatpush1.msra.mxu0 %v948
      %1149 = vmatprep.subr.mxu0 0.0
      %1150 = vmatpush1.msra.mxu0 %v949
      %1151 = vmatprep.subr.mxu0 0.0
      %1152 = vmatpush1.msra.mxu0 %v950
      %1153 = vmatprep.subr.mxu0 0.0
      %1154 = vmatpush1.msra.mxu0 %v951
      %1155 = vmatprep.subr.mxu0 0.0
      %1156 = vmatpush1.msra.mxu0 %v952
      %1157 = vmatprep.subr.mxu0 0.0
      %1158 = vmatpush1.msra.mxu0 %v953
      %1159 = vmatprep.subr.mxu0 0.0
      %1160 = vmatpush1.msra.mxu0 %v954
      %1161 = vmatprep.subr.mxu0 0.0
      %1162 = vmatpush1.msra.mxu0 %v955
      %1163 = vmatprep.subr.mxu0 0.0
      %1164 = vmatpush1.msra.mxu0 %v956
      %1165 = vmatprep.subr.mxu0 0.0
      %1166 = vmatpush1.msra.mxu0 %v957
      %1167 = vmatprep.subr.mxu0 0.0
      %1168 = vmatpush1.msra.mxu0 %v958
      %1169 = vmatprep.subr.mxu0 0.0
      %1170 = vmatpush1.msra.mxu0 %v959
      %1171 = vmatprep.subr.mxu0 0.0
      %1172 = vmatpush1.msra.mxu0 %v960
      %1173 = vmatprep.subr.mxu0 0.0
      %1174 = vmatpush1.msra.mxu0 %v961
      %1175 = vmatprep.subr.mxu0 0.0
      %1176 = vmatpush1.msra.mxu0 %v962
      %1177 = vmatprep.subr.mxu0 0.0
      %1178 = vmatpush1.msra.mxu0 %v963
      %1179 = vmatprep.subr.mxu0 0.0
      %1180 = vmatpush1.msra.mxu0 %v964
      %1181 = vmatprep.subr.mxu0 0.0
      %1182 = vmatpush1.msra.mxu0 %v965
      %1183 = vmatprep.subr.mxu0 0.0
      %1184 = vmatpush1.msra.mxu0 %v966
      %1185 = vmatprep.subr.mxu0 0.0
      %1186 = vmatpush1.msra.mxu0 %v967
      %1187 = vmatprep.subr.mxu0 0.0
      %1188 = vmatpush1.msra.mxu0 %v968
      %1189 = vmatprep.subr.mxu0 0.0
      %1190 = vmatpush1.msra.mxu0 %v969
      %1191 = vmatprep.subr.mxu0 0.0
      %1192 = vmatpush1.msra.mxu0 %v970
      %1193 = vmatprep.subr.mxu0 0.0
      %1194 = vmatpush1.msra.mxu0 %v971
      %1195 = vmatprep.subr.mxu0 0.0
      %1196 = vmatpush1.msra.mxu0 %v972
      %1197 = vmatprep.subr.mxu0 0.0
      %1198 = vmatpush1.msra.mxu0 %v973
      %1199 = vmatprep.subr.mxu0 0.0
      %1200 = vmatpush1.msra.mxu0 %v974
      %1201 = vmatprep.mubr.f32.mxu0 %v890
      %1202 = vmatmul.mubr.f32.gmra.mrb[0].mxu0 %v889
      %v1203 = vpop.f32.mrb[0].mxu0
      %v1204 = vadd.f32 %v1124, %v1203
      %v1205 = vpop.f32.mrb[0].mxu0
      %1206 = vmatprep.mubr.f32.mxu0 %v898
      %1207 = vmatmul.mubr.f32.gmra.mrb[0].mxu0 %v897
      %v1208 = vpop.f32.mrb[0].mxu0
      %v1209 = vadd.f32 %v1129, %v1208
      %v1210 = vpop.f32.mrb[0].mxu0
      %1211 = vmatprep.mubr.f32.mxu0 %v906
      %1212 = vmatmul.mubr.f32.gmra.mrb[0].mxu0 %v905
      %v1213 = vpop.f32.mrb[0].mxu0
      %v1214 = vadd.f32 %v1134, %v1213
      %v1215 = vpop.f32.mrb[0].mxu0
      %1216 = vdwg.mxu0
      %1217 = vmatprep.subr.mxu0 0.0
      %1218 = vmatpush1.msra.mxu0 %v975
      %1219 = vmatprep.subr.mxu0 0.0
      %1220 = vmatpush1.msra.mxu0 %v976
      %1221 = vmatprep.subr.mxu0 0.0
      %1222 = vmatpush1.msra.mxu0 %v977
      %1223 = vmatprep.subr.mxu0 0.0
      %1224 = vmatpush1.msra.mxu0 %v978
      %1225 = vmatprep.subr.mxu0 0.0
      %1226 = vmatpush1.msra.mxu0 %v979
      %1227 = vmatprep.subr.mxu0 0.0
      %1228 = vmatpush1.msra.mxu0 %v980
      %1229 = vmatprep.subr.mxu0 0.0
      %1230 = vmatpush1.msra.mxu0 %v981
      %1231 = vmatprep.subr.mxu0 0.0
      %1232 = vmatpush1.msra.mxu0 %v982
      %1233 = vmatprep.subr.mxu0 0.0
      %1234 = vmatpush1.msra.mxu0 %v983
      %1235 = vmatprep.subr.mxu0 0.0
      %1236 = vmatpush1.msra.mxu0 %v984
      %1237 = vmatprep.subr.mxu0 0.0
      %1238 = vmatpush1.msra.mxu0 %v985
      %1239 = vmatprep.subr.mxu0 0.0
      %1240 = vmatpush1.msra.mxu0 %v986
      %1241 = vmatprep.subr.mxu0 0.0
      %1242 = vmatpush1.msra.mxu0 %v987
      %1243 = vmatprep.subr.mxu0 0.0
      %1244 = vmatpush1.msra.mxu0 %v988
      %1245 = vmatprep.subr.mxu0 0.0
      %1246 = vmatpush1.msra.mxu0 %v989
      %1247 = vmatprep.subr.mxu0 0.0
      %1248 = vmatpush1.msra.mxu0 %v990
      %1249 = vmatprep.subr.mxu0 0.0
      %1250 = vmatpush1.msra.mxu0 %v991
      %1251 = vmatprep.subr.mxu0 0.0
      %1252 = vmatpush1.msra.mxu0 %v992
      %1253 = vmatprep.subr.mxu0 0.0
      %1254 = vmatpush1.msra.mxu0 %v993
      %1255 = vmatprep.subr.mxu0 0.0
      %1256 = vmatpush1.msra.mxu0 %v994
      %1257 = vmatprep.subr.mxu0 0.0
      %1258 = vmatpush1.msra.mxu0 %v995
      %1259 = vmatprep.subr.mxu0 0.0
      %1260 = vmatpush1.msra.mxu0 %v996
      %1261 = vmatprep.subr.mxu0 0.0
      %1262 = vmatpush1.msra.mxu0 %v997
      %1263 = vmatprep.subr.mxu0 0.0
      %1264 = vmatpush1.msra.mxu0 %v998
      %1265 = vmatprep.subr.mxu0 0.0
      %1266 = vmatpush1.msra.mxu0 %v999
      %1267 = vmatprep.subr.mxu0 0.0
      %1268 = vmatpush1.msra.mxu0 %v1000
      %1269 = vmatprep.subr.mxu0 0.0
      %1270 = vmatpush1.msra.mxu0 %v1001
      %1271 = vmatprep.subr.mxu0 0.0
      %1272 = vmatpush1.msra.mxu0 %v1002
      %1273 = vmatprep.subr.mxu0 0.0
      %1274 = vmatpush1.msra.mxu0 %v1003
      %1275 = vmatprep.subr.mxu0 0.0
      %1276 = vmatpush1.msra.mxu0 %v1004
      %1277 = vmatprep.subr.mxu0 0.0
      %1278 = vmatpush1.msra.mxu0 %v1005
      %1279 = vmatprep.subr.mxu0 0.0
      %1280 = vmatpush1.msra.mxu0 %v1006
      %1281 = vmatprep.mubr.f32.mxu0 %v892
      %1282 = vmatmul.mubr.f32.gmra.mrb[0].mxu0 %v891
      %v1283 = vpop.f32.mrb[0].mxu0
      %v1284 = vadd.f32 %v1204, %v1283
      %v1285 = vpop.f32.mrb[0].mxu0
      %1286 = vmatprep.mubr.f32.mxu0 %v900
      %1287 = vmatmul.mubr.f32.gmra.mrb[0].mxu0 %v899
      %v1288 = vpop.f32.mrb[0].mxu0
      %v1289 = vadd.f32 %v1209, %v1288
      %v1290 = vpop.f32.mrb[0].mxu0
      %1291 = vmatprep.mubr.f32.mxu0 %v908
      %1292 = vmatmul.mubr.f32.gmra.mrb[0].mxu0 %v907
      %v1293 = vpop.f32.mrb[0].mxu0
      %v1294 = vadd.f32 %v1214, %v1293
      %v1295 = vpop.f32.mrb[0].mxu0
      %1296 = vdwg.mxu0
      %1297 = vmatprep.subr.mxu0 0.0
      %1298 = vmatpush1.msra.mxu0 %v1007
      %1299 = vmatprep.subr.mxu0 0.0
      %1300 = vmatpush1.msra.mxu0 %v1008
      %1301 = vmatprep.subr.mxu0 0.0
      %1302 = vmatpush1.msra.mxu0 %v1009
      %1303 = vmatprep.subr.mxu0 0.0
      %1304 = vmatpush1.msra.mxu0 %v1010
      %1305 = vmatprep.subr.mxu0 0.0
      %1306 = vmatpush1.msra.mxu0 %v1011
      %1307 = vmatprep.subr.mxu0 0.0
      %1308 = vmatpush1.msra.mxu0 %v1012
      %1309 = vmatprep.subr.mxu0 0.0
      %1310 = vmatpush1.msra.mxu0 %v1013
      %1311 = vmatprep.subr.mxu0 0.0
      %1312 = vmatpush1.msra.mxu0 %v1014
      %1313 = vmatprep.subr.mxu0 0.0
      %1314 = vmatpush1.msra.mxu0 %v1015
      %1315 = vmatprep.subr.mxu0 0.0
      %1316 = vmatpush1.msra.mxu0 %v1016
      %1317 = vmatprep.subr.mxu0 0.0
      %1318 = vmatpush1.msra.mxu0 %v1017
      %1319 = vmatprep.subr.mxu0 0.0
      %1320 = vmatpush1.msra.mxu0 %v1018
      %1321 = vmatprep.subr.mxu0 0.0
      %1322 = vmatpush1.msra.mxu0 %v1019
      %1323 = vmatprep.subr.mxu0 0.0
      %1324 = vmatpush1.msra.mxu0 %v1020
      %1325 = vmatprep.subr.mxu0 0.0
      %1326 = vmatpush1.msra.mxu0 %v1021
      %1327 = vmatprep.subr.mxu0 0.0
      %1328 = vmatpush1.msra.mxu0 %v1022
      %1329 = vmatprep.subr.mxu0 0.0
      %1330 = vmatpush1.msra.mxu0 %v1023
      %1331 = vmatprep.subr.mxu0 0.0
      %1332 = vmatpush1.msra.mxu0 %v1024
      %1333 = vmatprep.subr.mxu0 0.0
      %1334 = vmatpush1.msra.mxu0 %v1025
      %1335 = vmatprep.subr.mxu0 0.0
      %1336 = vmatpush1.msra.mxu0 %v1026
      %1337 = vmatprep.subr.mxu0 0.0
      %1338 = vmatpush1.msra.mxu0 %v1027
      %1339 = vmatprep.subr.mxu0 0.0
      %1340 = vmatpush1.msra.mxu0 %v1028
      %1341 = vmatprep.subr.mxu0 0.0
      %1342 = vmatpush1.msra.mxu0 %v1029
      %1343 = vmatprep.subr.mxu0 0.0
      %1344 = vmatpush1.msra.mxu0 %v1030
      %1345 = vmatprep.subr.mxu0 0.0
      %1346 = vmatpush1.msra.mxu0 %v1031
      %1347 = vmatprep.subr.mxu0 0.0
      %1348 = vmatpush1.msra.mxu0 %v1032
      %1349 = vmatprep.subr.mxu0 0.0
      %1350 = vmatpush1.msra.mxu0 %v1033
      %1351 = vmatprep.subr.mxu0 0.0
      %1352 = vmatpush1.msra.mxu0 %v1034
      %1353 = vmatprep.subr.mxu0 0.0
      %1354 = vmatpush1.msra.mxu0 %v1035
      %1355 = vmatprep.subr.mxu0 0.0
      %1356 = vmatpush1.msra.mxu0 %v1036
      %1357 = vmatprep.subr.mxu0 0.0
      %1358 = vmatpush1.msra.mxu0 %v1037
      %1359 = vmatprep.subr.mxu0 0.0
      %1360 = vmatpush1.msra.mxu0 %v1038
      %1361 = vmatprep.mubr.f32.mxu0 %v894
      %1362 = vmatmul.mubr.f32.gmra.mrb[0].mxu0 %v893
      %v1363 = vpop.f32.mrb[0].mxu0
      %v1364 = vadd.f32 %v1284, %v1363
      %v1365 = vpop.f32.mrb[0].mxu0
      %1366 = vmatprep.mubr.f32.mxu0 %v902
      %1367 = vmatmul.mubr.f32.gmra.mrb[0].mxu0 %v901
      %v1368 = vpop.f32.mrb[0].mxu0
      %v1369 = vadd.f32 %v1289, %v1368
      %v1370 = vpop.f32.mrb[0].mxu0
      %1371 = vmatprep.mubr.f32.mxu0 %v910
      %1372 = vmatmul.mubr.f32.gmra.mrb[0].mxu0 %v909
      %v1373 = vpop.f32.mrb[0].mxu0
      %v1374 = vadd.f32 %v1294, %v1373
      %v1375 = vpop.f32.mrb[0].mxu0
      %1376 = vdwg.mxu0
      %vm1377 = vcmask 130048
      %1378 = vst.msk [vmem:[%s451] sm:$0xff] %vm1377, %v1364
      %1379 = vst.msk [vmem:[%s451 + $0x8] sm:$0xff] %vm1377, %v1369
      %1380 = vst.msk [vmem:[%s451 + $0x10] sm:$0xff] %vm1377, %v1374
      %p1381 = scmp.lt.s32.totalorder %s23, 1
      %s1382 = scalar_select %p1381, %s23, 1
      %s1383 = smul.addr %s1382, 6
      %s1384 = smul.addr %s1383, 8
      %s1385 = scalar_lea.vmem %s9, %s1384
      %p1386 = scmp.lt.s32.totalorder %s23, 1
      %s1387 = scalar_select %p1386, %s23, 1
      %s1388 = smul.addr %s1387, 3
      %s1389 = smul.addr %s1388, 8
      %s1390 = scalar_lea.vmem %s10, %s1389
      %p1391 = scmp.lt.s32.totalorder %s23, 1
      %s1392 = scalar_select %p1391, %s23, 1
      %s1393 = smul.addr %s1392, 3
      %s1394 = smul.addr %s1393, 8
      %s1395 = scalar_lea.vmem %s11, %s1394
      // Predicated region
      $region57: #{_forward_impl.1} parent=55 // pred_check
        %p1396 = pneg %p245
      $region58: #{_forward_impl.1} parent=55 // pred_check_branch
        %1398 = sbr.rel (%p1396) target = $region60
      $region59: #{_forward_impl.1} parent=55 // pred_region
        _
      $region60: #{_forward_impl.1} parent=55 // pred_fallthru
        _
      // Predicated region
      $region61: #{_forward_impl.1} parent=55 // pred_check
        %p1399 = pneg %p271
      $region62: #{_forward_impl.1} parent=55 // pred_check_branch
        %1401 = sbr.rel (%p1399) target = $region64
      $region63: #{_forward_impl.1} parent=55 // pred_region
        _
      $region64: #{_forward_impl.1} parent=55 // pred_fallthru
        _
      // Predicated region
      $region65: #{_forward_impl.1} parent=55 // pred_check
        %p1402 = pneg %p297
      $region66: #{_forward_impl.1} parent=55 // pred_check_branch
        %1404 = sbr.rel (%p1402) target = $region68
      $region67: #{_forward_impl.1} parent=55 // pred_region
        _
      $region68: #{_forward_impl.1} parent=55 // pred_fallthru
        _
    $region56: #{_forward_impl.1} parent=5 // pred_fallthru
      _
    %p1405 = scmp.le.s32.totalorder 2, %s18
    // Predicated region
    $region69: #{_forward_impl.1} parent=5 // pred_check
      %p1406 = pneg %p1405
    $region70: #{_forward_impl.1} parent=5 // pred_check_branch
      %1408 = sbr.rel (%p1406) target = $region72
    $region71: #{_forward_impl.1} parent=5 // pred_region
      %s1409 = ssub.s32 %s18, 2
      // Predicated region
      $region73: #{_forward_impl.1} parent=71 // pred_check
        %p1410 = pneg %p251
      $region74: #{_forward_impl.1} parent=71 // pred_check_branch
        %1412 = sbr.rel (%p1410) target = $region76
      $region75: #{_forward_impl.1} parent=71 // pred_region
        %p1413 = scmp.lt.s32.totalorder %s24, 1
        %s1414 = scalar_select %p1413, %s24, 1
        %s1415 = smul.addr %s1414, 6
        %s1416 = smul.addr %s1415, 8
        %s1417 = scalar_lea.vmem %s9, %s1416
      $region76: #{_forward_impl.1} parent=71 // pred_fallthru
        _
      // Predicated region
      $region77: #{_forward_impl.1} parent=71 // pred_check
        %p1418 = pneg %p277
      $region78: #{_forward_impl.1} parent=71 // pred_check_branch
        %1420 = sbr.rel (%p1418) target = $region80
      $region79: #{_forward_impl.1} parent=71 // pred_region
        %p1421 = scmp.lt.s32.totalorder %s24, 1
        %s1422 = scalar_select %p1421, %s24, 1
        %s1423 = smul.addr %s1422, 3
        %s1424 = smul.addr %s1423, 8
        %s1425 = scalar_lea.vmem %s10, %s1424
      $region80: #{_forward_impl.1} parent=71 // pred_fallthru
        _
      // Predicated region
      $region81: #{_forward_impl.1} parent=71 // pred_check
        %p1426 = pneg %p303
      $region82: #{_forward_impl.1} parent=71 // pred_check_branch
        %1428 = sbr.rel (%p1426) target = $region84
      $region83: #{_forward_impl.1} parent=71 // pred_region
        %p1429 = scmp.lt.s32.totalorder %s24, 1
        %s1430 = scalar_select %p1429, %s24, 1
        %s1431 = smul.addr %s1430, 3
        %s1432 = smul.addr %s1431, 8
        %s1433 = scalar_lea.vmem %s11, %s1432
      $region84: #{_forward_impl.1} parent=71 // pred_fallthru
        _
    $region72: #{_forward_impl.1} parent=5 // pred_fallthru
      _
  $region6: #{_forward_impl.1} parent=0 // loop_footer
    %s22 = sadd.s32 1, %s18
  $region7: #{_forward_impl.1} parent=0 // loop_footer_branch
    %17 = sbr.rel target = $region3
  $region8: #{_forward_impl.1} parent=0 // loop_exit
    _

</llo_original>
